<compile_context>
chip_gen: v7x
topology: tpu7x:2x2x1
jax: 0.10.0
libtpu: 0.0.40
codegen_flags: <defaults>
</compile_context>

<pallas_src>
import jax
import jax.numpy as jnp
from jax import lax
from jax.experimental import pallas as pl
from jax.experimental.pallas import tpu as pltpu  # noqa: F401  (single VMEM-resident call)

# ---------------------------------------------------------------------------
# Model hyper-params (small, consistent with the module's __init__)
# ---------------------------------------------------------------------------
EMBED = 32          # embed_size
HEADS = 4           # heads
HEAD_DIM = EMBED // HEADS
SEQ = 8             # L == S
BATCH = 2
LN_EPS = 1e-5


# ---------------------------------------------------------------------------
# Small integer helpers (use shifts/ANDs for power-of-two constants so the
# kernel never emits vector integer div/rem)
# ---------------------------------------------------------------------------
def _imod(x, m: int):
    if (m & (m - 1)) == 0:
        return jnp.bitwise_and(x, m - 1)
    return x % m


def _idiv(x, m: int):
    if (m & (m - 1)) == 0:
        return jnp.right_shift(x, m.bit_length() - 1)
    return x // m


# ---------------------------------------------------------------------------
# Single fused Pallas kernel (no grid: whole working set is VMEM-resident)
# ---------------------------------------------------------------------------
def _fused_self_attention_kernel(
    q_ref, k_ref, v_ref,      # (N*L, E), (N*S, E), (N*S, E) f32, seq-major rows (row = l*N + n)
    w_ref,                    # (E, 4E) bf16 packed [Wq^T | Wk^T | Wv^T | Wo^T]
    b_ref,                    # (6, E) f32 packed [bq; bk; bv; bo; gamma; beta]
    out_ref,                  # (N*L, E) f32, seq-major rows
    attn_ref,                 # (N*L, S) f32, batch-major rows (row = n*L + l), head-averaged
):
    E = out_ref.shape[1]
    Rq = q_ref.shape[0]                       # N * L
    Rk = k_ref.shape[0]                       # N * S
    N = BATCH
    L = Rq // N
    S = Rk // N
    H = HEADS
    Dh = E // H
    scale = 1.0 / float(Dh) ** 0.5
    inv_heads = 1.0 / float(H)

    # ---- unpack packed operands (static slices only) ----------------------
    W = w_ref[...]                            # bf16
    wq_b = W[:, 0 * E:1 * E]
    wk_b = W[:, 1 * E:2 * E]
    wv_b = W[:, 2 * E:3 * E]
    wo_b = W[:, 3 * E:4 * E]
    b = b_ref[...]                            # f32
    bq, bk, bv, bo = b[0:1, :], b[1:2, :], b[2:3, :], b[3:4, :]
    gamma, beta = b[4:5, :], b[5:6, :]

    x_q = q_ref[...]                          # f32 (also the residual)
    x_k = k_ref[...]
    x_v = v_ref[...]

    # ---- Q/K/V projections: 3 full-width bf16 MXU pushes ------------------
    q_all = jnp.dot(x_q.astype(jnp.bfloat16), wq_b, preferred_element_type=jnp.float32) + bq
    k_all = jnp.dot(x_k.astype(jnp.bfloat16), wk_b, preferred_element_type=jnp.float32) + bk
    v_all = jnp.dot(x_v.astype(jnp.bfloat16), wv_b, preferred_element_type=jnp.float32) + bv
    q_b = q_all.astype(jnp.bfloat16)
    k_b = k_all.astype(jnp.bfloat16)
    v_b = v_all.astype(jnp.bfloat16)

    # ---- block-diagonal "same batch" mask over the joint score matrix -----
    # row r = l*N + n (query), col c = s*N + n' (key); valid iff n == n'.
    ri = lax.broadcasted_iota(jnp.int32, (Rq, Rk), 0)
    ci = lax.broadcasted_iota(jnp.int32, (Rq, Rk), 1)
    same_batch = _imod(ri, N) == _imod(ci, N)

    o_heads = []
    p_sum = jnp.zeros((Rq, Rk), jnp.float32)
    for h in range(H):
        sl = slice(h * Dh, (h + 1) * Dh)
        qh, kh, vh = q_b[:, sl], k_b[:, sl], v_b[:, sl]
        # scores for BOTH batches at once; no transpose (contract Dh of both operands).
        s = lax.dot_general(qh, kh, (((1,), (1,)), ((), ())),
                            preferred_element_type=jnp.float32) * scale     # (Rq, Rk)
        s = jnp.where(same_batch, s, -1e30)            # cross-batch -> exp underflows to 0
        m = jnp.max(s, axis=-1, keepdims=True)
        e = jnp.exp(s - m)
        p = e * pl.reciprocal(jnp.sum(e, axis=-1, keepdims=True), approx=True)  # EUP divide
        p_sum = p_sum + p
        o_heads.append(jnp.dot(p.astype(jnp.bfloat16), vh,
                               preferred_element_type=jnp.float32))          # (Rq, Dh)

    # ---- output projection (ONE full-width matmul) + residual + LayerNorm -
    o_cat = jnp.concatenate(o_heads, axis=-1).astype(jnp.bfloat16)           # (Rq, E)
    x = jnp.dot(o_cat, wo_b, preferred_element_type=jnp.float32) + bo + x_q
    mean = jnp.mean(x, axis=-1, keepdims=True)
    cent = x - mean
    var = jnp.mean(cent * cent, axis=-1, keepdims=True)
    y = cent * lax.rsqrt(var + LN_EPS)
    out_ref[...] = (y * gamma + beta).astype(out_ref.dtype)

    # ---- attention weights: head-average + de-interleave to (N*L, S) ------
    # attn[n*L + l, s] = p_sum[l*N + n, s*N + n] / H.  Cross-batch entries of p_sum are
    # exactly 0, so a row permutation (P) and a lane compaction (C) -- two tiny 0/1
    # matmuls -- extract the per-batch weights with no strided slicing.
    pr = lax.broadcasted_iota(jnp.int32, (N * L, Rq), 0)
    pc = lax.broadcasted_iota(jnp.int32, (N * L, Rq), 1)
    P = (pc == _imod(pr, L) * N + _idiv(pr, L)).astype(jnp.float32)          # (N*L, Rq)
    cr = lax.broadcasted_iota(jnp.int32, (Rk, S), 0)
    cc = lax.broadcasted_iota(jnp.int32, (Rk, S), 1)
    C = (_idiv(cr, N) == cc).astype(jnp.float32)                             # (Rk, S)
    attn = jnp.dot(jnp.dot(P, p_sum, preferred_element_type=jnp.float32), C,
                   preferred_element_type=jnp.float32) * inv_heads
    attn_ref[...] = attn.astype(attn_ref.dtype)


# ---------------------------------------------------------------------------
# One-time parameter packing (hoisted out of the per-call forward)
# ---------------------------------------------------------------------------
def pack_params(params):
    E = EMBED
    in_w = params["in_proj_weight"]            # (3E, E): rows [Wq; Wk; Wv]
    in_b = params["in_proj_bias"]              # (3E,)
    w_packed = jnp.concatenate(
        [in_w[:E].T, in_w[E:2 * E].T, in_w[2 * E:].T, params["out_proj_weight"].T],
        axis=1).astype(jnp.bfloat16)           # (E, 4E)
    b_packed = jnp.stack(
        [in_b[:E], in_b[E:2 * E], in_b[2 * E:], params["out_proj_bias"],
         params["ln_gamma"], params["ln_beta"]], axis=0).astype(jnp.float32)   # (6, E)
    return w_packed, b_packed


# ---------------------------------------------------------------------------
# SelfAttention forward: free reshapes only + one pallas_call
# ---------------------------------------------------------------------------
def self_attention_forward(value, key, query, w_packed, b_packed):
    """value/key/query: (L, N, E).  Returns (output (L, N, E), attn_weights (N, L, S))."""
    L, N, E = query.shape
    S = key.shape[0]

    # (L, N, E) -> (L*N, E) is a free, contiguous reshape (no transpose copies).
    q2d = query.reshape(L * N, E)
    k2d = key.reshape(S * N, E)
    v2d = value.reshape(S * N, E)

    out2d, attn2d = pl.pallas_call(
        _fused_self_attention_kernel,
        out_shape=(
            jax.ShapeDtypeStruct((L * N, E), jnp.float32),
            jax.ShapeDtypeStruct((N * L, S), jnp.float32),
        ),
        # No grid / BlockSpecs: whole arrays (few KB) live in VMEM for a single invocation.
    )(q2d, k2d, v2d, w_packed, b_packed)

    return out2d.reshape(L, N, E), attn2d.reshape(N, L, S)


# ---------------------------------------------------------------------------
# Pure-JAX reference (mirrors nn.MultiheadAttention + residual + LayerNorm)
# ---------------------------------------------------------------------------
def _reference_forward(value, key, query, params):
    L, N, E = query.shape
    S = key.shape[0]
    H, Dh = HEADS, HEAD_DIM
    in_w, in_b = params["in_proj_weight"], params["in_proj_bias"]
    q = query @ in_w[:E].T + in_b[:E]
    k = key @ in_w[E:2 * E].T + in_b[E:2 * E]
    v = value @ in_w[2 * E:].T + in_b[2 * E:]

    def split(t, T):
        return t.reshape(T, N, H, Dh).transpose(1, 2, 0, 3)      # (N, H, T, Dh)

    qh, kh, vh = split(q, L), split(k, S), split(v, S)
    s = jnp.einsum("nhld,nhsd->nhls", qh, kh) / (float(Dh) ** 0.5)
    p = jax.nn.softmax(s, axis=-1)
    o = jnp.einsum("nhls,nhsd->nhld", p, vh).transpose(2, 0, 1, 3).reshape(L, N, E)
    attn = o @ params["out_proj_weight"].T + params["out_proj_bias"]
    x = attn + query
    mean = x.mean(-1, keepdims=True)
    var = ((x - mean) ** 2).mean(-1, keepdims=True)
    out = (x - mean) / jnp.sqrt(var + LN_EPS) * params["ln_gamma"] + params["ln_beta"]
    return out, p.mean(axis=1)


# ---------------------------------------------------------------------------
# Deterministic parameter init + demo run
# ---------------------------------------------------------------------------
def init_params(rng):
    k1, k2, k3, k4 = jax.random.split(rng, 4)
    return {
        "in_proj_weight": 0.1 * jax.random.normal(k1, (3 * EMBED, EMBED), jnp.float32),
        "in_proj_bias": 0.1 * jax.random.normal(k2, (3 * EMBED,), jnp.float32),
        "out_proj_weight": 0.1 * jax.random.normal(k3, (EMBED, EMBED), jnp.float32),
        "out_proj_bias": 0.1 * jax.random.normal(k4, (EMBED,), jnp.float32),
        "ln_gamma": jnp.ones((EMBED,), jnp.float32),
        "ln_beta": jnp.zeros((EMBED,), jnp.float32),
    }


if __name__ == "__main__":
    root = jax.random.PRNGKey(0)
    kp, kv, kk, kq = jax.random.split(root, 4)
    params = init_params(kp)
    # Pack weights ONCE (outside the jitted forward) so the per-call graph has no relayouts.
    w_packed, b_packed = pack_params(params)

    # (L, N, E) seq-first inputs, as nn.MultiheadAttention expects by default.
    value = jax.random.normal(kv, (SEQ, BATCH, EMBED), jnp.float32)
    key = jax.random.normal(kk, (SEQ, BATCH, EMBED), jnp.float32)
    query = jax.random.normal(kq, (SEQ, BATCH, EMBED), jnp.float32)

    fwd = jax.jit(self_attention_forward)
    output, attn_weights = fwd(value, key, query, w_packed, b_packed)
    jax.block_until_ready((output, attn_weights))

    assert output.shape == (SEQ, BATCH, EMBED)
    assert attn_weights.shape == (BATCH, SEQ, SEQ)
    # Softmax rows (after head-averaging) sum to ~1 (approx EUP reciprocal -> relaxed atol).
    assert jnp.allclose(jnp.sum(attn_weights, axis=-1), 1.0, atol=5e-3)

    # Numerical sanity check against a pure-JAX reference of the PyTorch module
    # (bf16 matmul operands in the kernel -> 2e-2 tolerance).
    ref_out, ref_w = _reference_forward(value, key, query, params)
    assert jnp.allclose(output, ref_out, atol=2e-2, rtol=2e-2)
    assert jnp.allclose(attn_weights, ref_w, atol=2e-2, rtol=2e-2)

    print("KERNEL_OK")
</pallas_src>

<mosaic_0001>
module attributes {stable_mosaic.version = 11 : i64} {
  func.func @_fused_self_attention_kernel(%arg0: memref<16x32xf32, #tpu.memory_space<vmem>>, %arg1: memref<16x32xf32, #tpu.memory_space<vmem>>, %arg2: memref<16x32xf32, #tpu.memory_space<vmem>>, %arg3: memref<32x128xbf16, #tpu.memory_space<vmem>>, %arg4: memref<6x32xf32, #tpu.memory_space<vmem>>, %arg5: memref<16x32xf32, #tpu.memory_space<vmem>>, %arg6: memref<16x8xf32, #tpu.memory_space<vmem>>) attributes {dimension_semantics = [], scalar_prefetch = 0 : i64, scratch_operands = 0 : i64, tpu.core_type = #tpu.core_type<tc>} {
    %c0 = arith.constant 0 : index
    %c0_0 = arith.constant 0 : index
    %0 = vector.load %arg3[%c0, %c0_0] : memref<32x128xbf16, #tpu.memory_space<vmem>>, vector<32x128xbf16>
    %1 = vector.extract_strided_slice %0 {offsets = [0, 0], sizes = [32, 32], strides = [1, 1]} : vector<32x128xbf16> to vector<32x32xbf16>
    %2 = vector.extract_strided_slice %0 {offsets = [0, 32], sizes = [32, 32], strides = [1, 1]} : vector<32x128xbf16> to vector<32x32xbf16>
    %3 = vector.extract_strided_slice %0 {offsets = [0, 64], sizes = [32, 32], strides = [1, 1]} : vector<32x128xbf16> to vector<32x32xbf16>
    %4 = vector.extract_strided_slice %0 {offsets = [0, 96], sizes = [32, 32], strides = [1, 1]} : vector<32x128xbf16> to vector<32x32xbf16>
    %c0_1 = arith.constant 0 : index
    %c0_2 = arith.constant 0 : index
    %5 = vector.load %arg4[%c0_1, %c0_2] : memref<6x32xf32, #tpu.memory_space<vmem>>, vector<6x32xf32>
    %6 = vector.extract_strided_slice %5 {offsets = [0, 0], sizes = [1, 32], strides = [1, 1]} : vector<6x32xf32> to vector<1x32xf32>
    %7 = vector.extract_strided_slice %5 {offsets = [1, 0], sizes = [1, 32], strides = [1, 1]} : vector<6x32xf32> to vector<1x32xf32>
    %8 = vector.extract_strided_slice %5 {offsets = [2, 0], sizes = [1, 32], strides = [1, 1]} : vector<6x32xf32> to vector<1x32xf32>
    %9 = vector.extract_strided_slice %5 {offsets = [3, 0], sizes = [1, 32], strides = [1, 1]} : vector<6x32xf32> to vector<1x32xf32>
    %10 = vector.extract_strided_slice %5 {offsets = [4, 0], sizes = [1, 32], strides = [1, 1]} : vector<6x32xf32> to vector<1x32xf32>
    %11 = vector.extract_strided_slice %5 {offsets = [5, 0], sizes = [1, 32], strides = [1, 1]} : vector<6x32xf32> to vector<1x32xf32>
    %c0_3 = arith.constant 0 : index
    %c0_4 = arith.constant 0 : index
    %12 = vector.load %arg0[%c0_3, %c0_4] : memref<16x32xf32, #tpu.memory_space<vmem>>, vector<16x32xf32>
    %c0_5 = arith.constant 0 : index
    %c0_6 = arith.constant 0 : index
    %13 = vector.load %arg1[%c0_5, %c0_6] : memref<16x32xf32, #tpu.memory_space<vmem>>, vector<16x32xf32>
    %c0_7 = arith.constant 0 : index
    %c0_8 = arith.constant 0 : index
    %14 = vector.load %arg2[%c0_7, %c0_8] : memref<16x32xf32, #tpu.memory_space<vmem>>, vector<16x32xf32>
    %15 = arith.truncf %12 : vector<16x32xf32> to vector<16x32xbf16>
    %cst = arith.constant dense<0.000000e+00> : vector<16x32xf32>
    %16 = tpu.matmul %15, %1, %cst {dimension_numbers = #tpu.dot_dimension_numbers<[1], [0], [0], [1], [0, 0, 1, 1], [], []>} : vector<16x32xbf16>, vector<32x32xbf16>, vector<16x32xf32> -> vector<16x32xf32>
    %17 = vector.broadcast %6 : vector<1x32xf32> to vector<16x32xf32>
    %18 = arith.addf %16, %17 : vector<16x32xf32>
    %19 = arith.truncf %13 : vector<16x32xf32> to vector<16x32xbf16>
    %cst_9 = arith.constant dense<0.000000e+00> : vector<16x32xf32>
    %20 = tpu.matmul %19, %2, %cst_9 {dimension_numbers = #tpu.dot_dimension_numbers<[1], [0], [0], [1], [0, 0, 1, 1], [], []>} : vector<16x32xbf16>, vector<32x32xbf16>, vector<16x32xf32> -> vector<16x32xf32>
    %21 = vector.broadcast %7 : vector<1x32xf32> to vector<16x32xf32>
    %22 = arith.addf %20, %21 : vector<16x32xf32>
    %23 = arith.truncf %14 : vector<16x32xf32> to vector<16x32xbf16>
    %cst_10 = arith.constant dense<0.000000e+00> : vector<16x32xf32>
    %24 = tpu.matmul %23, %3, %cst_10 {dimension_numbers = #tpu.dot_dimension_numbers<[1], [0], [0], [1], [0, 0, 1, 1], [], []>} : vector<16x32xbf16>, vector<32x32xbf16>, vector<16x32xf32> -> vector<16x32xf32>
    %25 = vector.broadcast %8 : vector<1x32xf32> to vector<16x32xf32>
    %26 = arith.addf %24, %25 : vector<16x32xf32>
    %27 = arith.truncf %18 : vector<16x32xf32> to vector<16x32xbf16>
    %28 = arith.truncf %22 : vector<16x32xf32> to vector<16x32xbf16>
    %29 = arith.truncf %26 : vector<16x32xf32> to vector<16x32xbf16>
    %30 = tpu.iota {dimensions = array<i32: 0>} : vector<16x16xi32>
    %31 = tpu.iota {dimensions = array<i32: 1>} : vector<16x16xi32>
    %c1_i32 = arith.constant 1 : i32
    %32 = vector.broadcast %c1_i32 : i32 to vector<16x16xi32>
    %33 = arith.andi %30, %32 : vector<16x16xi32>
    %c1_i32_11 = arith.constant 1 : i32
    %34 = vector.broadcast %c1_i32_11 : i32 to vector<16x16xi32>
    %35 = arith.andi %31, %34 : vector<16x16xi32>
    %36 = arith.cmpi eq, %33, %35 : vector<16x16xi32>
    %cst_12 = arith.constant 0.000000e+00 : f32
    %37 = vector.broadcast %cst_12 : f32 to vector<16x16xf32>
    %38 = vector.extract_strided_slice %27 {offsets = [0, 0], sizes = [16, 8], strides = [1, 1]} : vector<16x32xbf16> to vector<16x8xbf16>
    %39 = vector.extract_strided_slice %28 {offsets = [0, 0], sizes = [16, 8], strides = [1, 1]} : vector<16x32xbf16> to vector<16x8xbf16>
    %40 = vector.extract_strided_slice %29 {offsets = [0, 0], sizes = [16, 8], strides = [1, 1]} : vector<16x32xbf16> to vector<16x8xbf16>
    %cst_13 = arith.constant dense<0.000000e+00> : vector<16x16xf32>
    %41 = tpu.matmul %38, %39, %cst_13 {dimension_numbers = #tpu.dot_dimension_numbers<[1], [1], [0], [0], [0, 0, 1, 0], [], []>} : vector<16x8xbf16>, vector<16x8xbf16>, vector<16x16xf32> -> vector<16x16xf32>
    %cst_14 = arith.constant 0.353553385 : f32
    %42 = vector.broadcast %cst_14 : f32 to vector<16x16xf32>
    %43 = arith.mulf %41, %42 : vector<16x16xf32>
    %cst_15 = arith.constant -1.000000e+30 : f32
    %44 = vector.broadcast %cst_15 : f32 to vector<16x16xf32>
    %45 = arith.select %36, %43, %44 : vector<16x16xi1>, vector<16x16xf32>
    %cst_16 = arith.constant dense<0xFF800000> : vector<16xf32>
    %46 = vector.multi_reduction <maximumf>, %45, %cst_16 [1] : vector<16x16xf32> to vector<16xf32>
    %47 = vector.shape_cast %46 : vector<16xf32> to vector<16x1xf32>
    %48 = vector.broadcast %47 : vector<16x1xf32> to vector<16x16xf32>
    %49 = arith.subf %45, %48 : vector<16x16xf32>
    %50 = math.exp %49 : vector<16x16xf32>
    %cst_17 = arith.constant dense<0.000000e+00> : vector<16xf32>
    %51 = vector.multi_reduction <add>, %50, %cst_17 [1] : vector<16x16xf32> to vector<16xf32>
    %52 = vector.shape_cast %51 : vector<16xf32> to vector<16x1xf32>
    %53 = tpu.reciprocal %52 {approx = true} : vector<16x1xf32> -> vector<16x1xf32>
    %54 = vector.broadcast %53 : vector<16x1xf32> to vector<16x16xf32>
    %55 = arith.mulf %50, %54 : vector<16x16xf32>
    %56 = arith.addf %37, %55 : vector<16x16xf32>
    %57 = arith.truncf %55 : vector<16x16xf32> to vector<16x16xbf16>
    %cst_18 = arith.constant dense<0.000000e+00> : vector<16x8xf32>
    %58 = tpu.matmul %57, %40, %cst_18 {dimension_numbers = #tpu.dot_dimension_numbers<[1], [0], [0], [1], [0, 0, 1, 1], [], []>} : vector<16x16xbf16>, vector<16x8xbf16>, vector<16x8xf32> -> vector<16x8xf32>
    %59 = vector.extract_strided_slice %27 {offsets = [0, 8], sizes = [16, 8], strides = [1, 1]} : vector<16x32xbf16> to vector<16x8xbf16>
    %60 = vector.extract_strided_slice %28 {offsets = [0, 8], sizes = [16, 8], strides = [1, 1]} : vector<16x32xbf16> to vector<16x8xbf16>
    %61 = vector.extract_strided_slice %29 {offsets = [0, 8], sizes = [16, 8], strides = [1, 1]} : vector<16x32xbf16> to vector<16x8xbf16>
    %cst_19 = arith.constant dense<0.000000e+00> : vector<16x16xf32>
    %62 = tpu.matmul %59, %60, %cst_19 {dimension_numbers = #tpu.dot_dimension_numbers<[1], [1], [0], [0], [0, 0, 1, 0], [], []>} : vector<16x8xbf16>, vector<16x8xbf16>, vector<16x16xf32> -> vector<16x16xf32>
    %cst_20 = arith.constant 0.353553385 : f32
    %63 = vector.broadcast %cst_20 : f32 to vector<16x16xf32>
    %64 = arith.mulf %62, %63 : vector<16x16xf32>
    %cst_21 = arith.constant -1.000000e+30 : f32
    %65 = vector.broadcast %cst_21 : f32 to vector<16x16xf32>
    %66 = arith.select %36, %64, %65 : vector<16x16xi1>, vector<16x16xf32>
    %cst_22 = arith.constant dense<0xFF800000> : vector<16xf32>
    %67 = vector.multi_reduction <maximumf>, %66, %cst_22 [1] : vector<16x16xf32> to vector<16xf32>
    %68 = vector.shape_cast %67 : vector<16xf32> to vector<16x1xf32>
    %69 = vector.broadcast %68 : vector<16x1xf32> to vector<16x16xf32>
    %70 = arith.subf %66, %69 : vector<16x16xf32>
    %71 = math.exp %70 : vector<16x16xf32>
    %cst_23 = arith.constant dense<0.000000e+00> : vector<16xf32>
    %72 = vector.multi_reduction <add>, %71, %cst_23 [1] : vector<16x16xf32> to vector<16xf32>
    %73 = vector.shape_cast %72 : vector<16xf32> to vector<16x1xf32>
    %74 = tpu.reciprocal %73 {approx = true} : vector<16x1xf32> -> vector<16x1xf32>
    %75 = vector.broadcast %74 : vector<16x1xf32> to vector<16x16xf32>
    %76 = arith.mulf %71, %75 : vector<16x16xf32>
    %77 = arith.addf %56, %76 : vector<16x16xf32>
    %78 = arith.truncf %76 : vector<16x16xf32> to vector<16x16xbf16>
    %cst_24 = arith.constant dense<0.000000e+00> : vector<16x8xf32>
    %79 = tpu.matmul %78, %61, %cst_24 {dimension_numbers = #tpu.dot_dimension_numbers<[1], [0], [0], [1], [0, 0, 1, 1], [], []>} : vector<16x16xbf16>, vector<16x8xbf16>, vector<16x8xf32> -> vector<16x8xf32>
    %80 = vector.extract_strided_slice %27 {offsets = [0, 16], sizes = [16, 8], strides = [1, 1]} : vector<16x32xbf16> to vector<16x8xbf16>
    %81 = vector.extract_strided_slice %28 {offsets = [0, 16], sizes = [16, 8], strides = [1, 1]} : vector<16x32xbf16> to vector<16x8xbf16>
    %82 = vector.extract_strided_slice %29 {offsets = [0, 16], sizes = [16, 8], strides = [1, 1]} : vector<16x32xbf16> to vector<16x8xbf16>
    %cst_25 = arith.constant dense<0.000000e+00> : vector<16x16xf32>
    %83 = tpu.matmul %80, %81, %cst_25 {dimension_numbers = #tpu.dot_dimension_numbers<[1], [1], [0], [0], [0, 0, 1, 0], [], []>} : vector<16x8xbf16>, vector<16x8xbf16>, vector<16x16xf32> -> vector<16x16xf32>
    %cst_26 = arith.constant 0.353553385 : f32
    %84 = vector.broadcast %cst_26 : f32 to vector<16x16xf32>
    %85 = arith.mulf %83, %84 : vector<16x16xf32>
    %cst_27 = arith.constant -1.000000e+30 : f32
    %86 = vector.broadcast %cst_27 : f32 to vector<16x16xf32>
    %87 = arith.select %36, %85, %86 : vector<16x16xi1>, vector<16x16xf32>
    %cst_28 = arith.constant dense<0xFF800000> : vector<16xf32>
    %88 = vector.multi_reduction <maximumf>, %87, %cst_28 [1] : vector<16x16xf32> to vector<16xf32>
    %89 = vector.shape_cast %88 : vector<16xf32> to vector<16x1xf32>
    %90 = vector.broadcast %89 : vector<16x1xf32> to vector<16x16xf32>
    %91 = arith.subf %87, %90 : vector<16x16xf32>
    %92 = math.exp %91 : vector<16x16xf32>
    %cst_29 = arith.constant dense<0.000000e+00> : vector<16xf32>
    %93 = vector.multi_reduction <add>, %92, %cst_29 [1] : vector<16x16xf32> to vector<16xf32>
    %94 = vector.shape_cast %93 : vector<16xf32> to vector<16x1xf32>
    %95 = tpu.reciprocal %94 {approx = true} : vector<16x1xf32> -> vector<16x1xf32>
    %96 = vector.broadcast %95 : vector<16x1xf32> to vector<16x16xf32>
    %97 = arith.mulf %92, %96 : vector<16x16xf32>
    %98 = arith.addf %77, %97 : vector<16x16xf32>
    %99 = arith.truncf %97 : vector<16x16xf32> to vector<16x16xbf16>
    %cst_30 = arith.constant dense<0.000000e+00> : vector<16x8xf32>
    %100 = tpu.matmul %99, %82, %cst_30 {dimension_numbers = #tpu.dot_dimension_numbers<[1], [0], [0], [1], [0, 0, 1, 1], [], []>} : vector<16x16xbf16>, vector<16x8xbf16>, vector<16x8xf32> -> vector<16x8xf32>
    %101 = vector.extract_strided_slice %27 {offsets = [0, 24], sizes = [16, 8], strides = [1, 1]} : vector<16x32xbf16> to vector<16x8xbf16>
    %102 = vector.extract_strided_slice %28 {offsets = [0, 24], sizes = [16, 8], strides = [1, 1]} : vector<16x32xbf16> to vector<16x8xbf16>
    %103 = vector.extract_strided_slice %29 {offsets = [0, 24], sizes = [16, 8], strides = [1, 1]} : vector<16x32xbf16> to vector<16x8xbf16>
    %cst_31 = arith.constant dense<0.000000e+00> : vector<16x16xf32>
    %104 = tpu.matmul %101, %102, %cst_31 {dimension_numbers = #tpu.dot_dimension_numbers<[1], [1], [0], [0], [0, 0, 1, 0], [], []>} : vector<16x8xbf16>, vector<16x8xbf16>, vector<16x16xf32> -> vector<16x16xf32>
    %cst_32 = arith.constant 0.353553385 : f32
    %105 = vector.broadcast %cst_32 : f32 to vector<16x16xf32>
    %106 = arith.mulf %104, %105 : vector<16x16xf32>
    %cst_33 = arith.constant -1.000000e+30 : f32
    %107 = vector.broadcast %cst_33 : f32 to vector<16x16xf32>
    %108 = arith.select %36, %106, %107 : vector<16x16xi1>, vector<16x16xf32>
    %cst_34 = arith.constant dense<0xFF800000> : vector<16xf32>
    %109 = vector.multi_reduction <maximumf>, %108, %cst_34 [1] : vector<16x16xf32> to vector<16xf32>
    %110 = vector.shape_cast %109 : vector<16xf32> to vector<16x1xf32>
    %111 = vector.broadcast %110 : vector<16x1xf32> to vector<16x16xf32>
    %112 = arith.subf %108, %111 : vector<16x16xf32>
    %113 = math.exp %112 : vector<16x16xf32>
    %cst_35 = arith.constant dense<0.000000e+00> : vector<16xf32>
    %114 = vector.multi_reduction <add>, %113, %cst_35 [1] : vector<16x16xf32> to vector<16xf32>
    %115 = vector.shape_cast %114 : vector<16xf32> to vector<16x1xf32>
    %116 = tpu.reciprocal %115 {approx = true} : vector<16x1xf32> -> vector<16x1xf32>
    %117 = vector.broadcast %116 : vector<16x1xf32> to vector<16x16xf32>
    %118 = arith.mulf %113, %117 : vector<16x16xf32>
    %119 = arith.addf %98, %118 : vector<16x16xf32>
    %120 = arith.truncf %118 : vector<16x16xf32> to vector<16x16xbf16>
    %cst_36 = arith.constant dense<0.000000e+00> : vector<16x8xf32>
    %121 = tpu.matmul %120, %103, %cst_36 {dimension_numbers = #tpu.dot_dimension_numbers<[1], [0], [0], [1], [0, 0, 1, 1], [], []>} : vector<16x16xbf16>, vector<16x8xbf16>, vector<16x8xf32> -> vector<16x8xf32>
    %122 = tpu.concatenate %58, %79, %100, %121 in 1 : vector<16x8xf32>, vector<16x8xf32>, vector<16x8xf32>, vector<16x8xf32> -> vector<16x32xf32>
    %123 = arith.truncf %122 : vector<16x32xf32> to vector<16x32xbf16>
    %cst_37 = arith.constant dense<0.000000e+00> : vector<16x32xf32>
    %124 = tpu.matmul %123, %4, %cst_37 {dimension_numbers = #tpu.dot_dimension_numbers<[1], [0], [0], [1], [0, 0, 1, 1], [], []>} : vector<16x32xbf16>, vector<32x32xbf16>, vector<16x32xf32> -> vector<16x32xf32>
    %125 = vector.broadcast %9 : vector<1x32xf32> to vector<16x32xf32>
    %126 = arith.addf %124, %125 : vector<16x32xf32>
    %127 = arith.addf %126, %12 : vector<16x32xf32>
    %cst_38 = arith.constant dense<0.000000e+00> : vector<16xf32>
    %128 = vector.multi_reduction <add>, %127, %cst_38 [1] : vector<16x32xf32> to vector<16xf32>
    %129 = vector.shape_cast %128 : vector<16xf32> to vector<16x1xf32>
    %cst_39 = arith.constant 3.200000e+01 : f32
    %130 = vector.broadcast %cst_39 : f32 to vector<16x1xf32>
    %131 = arith.divf %129, %130 : vector<16x1xf32>
    %132 = vector.broadcast %131 : vector<16x1xf32> to vector<16x32xf32>
    %133 = arith.subf %127, %132 : vector<16x32xf32>
    %134 = arith.mulf %133, %133 : vector<16x32xf32>
    %cst_40 = arith.constant dense<0.000000e+00> : vector<16xf32>
    %135 = vector.multi_reduction <add>, %134, %cst_40 [1] : vector<16x32xf32> to vector<16xf32>
    %136 = vector.shape_cast %135 : vector<16xf32> to vector<16x1xf32>
    %cst_41 = arith.constant 3.200000e+01 : f32
    %137 = vector.broadcast %cst_41 : f32 to vector<16x1xf32>
    %138 = arith.divf %136, %137 : vector<16x1xf32>
    %cst_42 = arith.constant 9.99999974E-6 : f32
    %139 = vector.broadcast %cst_42 : f32 to vector<16x1xf32>
    %140 = arith.addf %138, %139 : vector<16x1xf32>
    %141 = math.rsqrt %140 : vector<16x1xf32>
    %142 = vector.broadcast %141 : vector<16x1xf32> to vector<16x32xf32>
    %143 = arith.mulf %133, %142 : vector<16x32xf32>
    %144 = vector.broadcast %10 : vector<1x32xf32> to vector<16x32xf32>
    %145 = arith.mulf %143, %144 : vector<16x32xf32>
    %146 = vector.broadcast %11 : vector<1x32xf32> to vector<16x32xf32>
    %147 = arith.addf %145, %146 : vector<16x32xf32>
    %c0_43 = arith.constant 0 : index
    %c0_44 = arith.constant 0 : index
    %148 = vector.load %arg5[%c0_43, %c0_44] : memref<16x32xf32, #tpu.memory_space<vmem>>, vector<16x32xf32>
    tpu.vector_store %arg5[%c0_43, %c0_44], %147 {strides = array<i32>} : memref<16x32xf32, #tpu.memory_space<vmem>>, vector<16x32xf32>,
    %149 = tpu.iota {dimensions = array<i32: 0>} : vector<16x16xi32>
    %150 = tpu.iota {dimensions = array<i32: 1>} : vector<16x16xi32>
    %c7_i32 = arith.constant 7 : i32
    %151 = vector.broadcast %c7_i32 : i32 to vector<16x16xi32>
    %152 = arith.andi %149, %151 : vector<16x16xi32>
    %c2_i32 = arith.constant 2 : i32
    %153 = vector.broadcast %c2_i32 : i32 to vector<16x16xi32>
    %154 = arith.muli %152, %153 : vector<16x16xi32>
    %c3_i32 = arith.constant 3 : i32
    %155 = vector.broadcast %c3_i32 : i32 to vector<16x16xi32>
    %156 = arith.shrsi %149, %155 : vector<16x16xi32>
    %157 = arith.addi %154, %156 : vector<16x16xi32>
    %158 = arith.cmpi eq, %150, %157 : vector<16x16xi32>
    %159 = arith.extui %158 : vector<16x16xi1> to vector<16x16xi32>
    %160 = arith.sitofp %159 : vector<16x16xi32> to vector<16x16xf32>
    %161 = tpu.iota {dimensions = array<i32: 0>} : vector<16x8xi32>
    %162 = tpu.iota {dimensions = array<i32: 1>} : vector<16x8xi32>
    %c1_i32_45 = arith.constant 1 : i32
    %163 = vector.broadcast %c1_i32_45 : i32 to vector<16x8xi32>
    %164 = arith.shrsi %161, %163 : vector<16x8xi32>
    %165 = arith.cmpi eq, %164, %162 : vector<16x8xi32>
    %166 = arith.extui %165 : vector<16x8xi1> to vector<16x8xi32>
    %167 = arith.sitofp %166 : vector<16x8xi32> to vector<16x8xf32>
    %cst_46 = arith.constant dense<0.000000e+00> : vector<16x16xf32>
    %168 = tpu.matmul %160, %119, %cst_46 {dimension_numbers = #tpu.dot_dimension_numbers<[1], [0], [0], [1], [0, 0, 1, 1], [], []>} : vector<16x16xf32>, vector<16x16xf32>, vector<16x16xf32> -> vector<16x16xf32>
    %cst_47 = arith.constant dense<0.000000e+00> : vector<16x8xf32>
    %169 = tpu.matmul %168, %167, %cst_47 {dimension_numbers = #tpu.dot_dimension_numbers<[1], [0], [0], [1], [0, 0, 1, 1], [], []>} : vector<16x16xf32>, vector<16x8xf32>, vector<16x8xf32> -> vector<16x8xf32>
    %cst_48 = arith.constant 2.500000e-01 : f32
    %170 = vector.broadcast %cst_48 : f32 to vector<16x8xf32>
    %171 = arith.mulf %169, %170 : vector<16x8xf32>
    %c0_49 = arith.constant 0 : index
    %c0_50 = arith.constant 0 : index
    %172 = vector.load %arg6[%c0_49, %c0_50] : memref<16x8xf32, #tpu.memory_space<vmem>>, vector<16x8xf32>
    tpu.vector_store %arg6[%c0_49, %c0_50], %171 {strides = array<i32>} : memref<16x8xf32, #tpu.memory_space<vmem>>, vector<16x8xf32>,
    return
  }
}

</mosaic_0001>

<llo_original>
// kernel: self_attention_forward.1
$region0: #{self_attention_forward.1}
  #allocation0 [shape = 'u32[]', space=smem, size = 0x4, offset = 0x4, fixed_abs, tag = 'smem constant byte address 0x4 - core index']
  #allocation1 [shape = 'u32[144,128]{1,0:T(1,128)}', space=vmem, size = 0x12000, scoped, tag = 'internal scratch']
  %s0 = inlined_call_operand.vmem [shape: f32[16,32], index: 0, kind: input, shape index: {}]
  %s1 = inlined_call_operand.hbm [shape: f32[16,32], index: 1, kind: input, shape index: {}]
  %s2 = inlined_call_operand.hbm [shape: f32[16,32], index: 2, kind: input, shape index: {}]
  %s3 = inlined_call_operand.hbm [shape: bf16[32,128], index: 3, kind: input, shape index: {}]
  %s4 = inlined_call_operand.vmem [shape: f32[6,32], index: 4, kind: input, shape index: {}]
  %s5 = inlined_call_operand.hbm [shape: f32[16,32], index: 5, kind: output, shape index: {0}]
  %s6 = inlined_call_operand.hbm [shape: f32[16,8], index: 6, kind: output, shape index: {1}]
  %7 = xla_tuple %s5, %s6
  %s8 = sld [smem:[#allocation0]]
  $region50: #{self_attention_forward.1} parent=0
    _
  %s10 = ssub.s32 1, %s8
  %s11 = scalar_select 0, %s10, %s8
  $region1: #{self_attention_forward.1} parent=0
    #allocation2 [shape = 'u8[8192]{0}', space=vmem, size = 0x2000, scoped, tag = 'input window, operand 1, single buffered']
    #allocation3 [shape = 's32[1]{0}', space=sflag, size = 0x4, scoped, tag = 'scoped memory for self_attention_forward.1']
    #allocation4 [shape = 's32[1]{0}', space=sflag, size = 0x4, scoped, tag = 'scoped memory for self_attention_forward.1']
    #allocation5 [shape = 'u8[8192]{0}', space=vmem, size = 0x2000, scoped, tag = 'input window, operand 2, single buffered']
    #allocation6 [shape = 's32[1]{0}', space=sflag, size = 0x4, scoped, tag = 'scoped memory for self_attention_forward.1']
    #allocation7 [shape = 'u8[8192]{0}', space=vmem, size = 0x2000, scoped, tag = 'input window, operand 3, single buffered']
    #allocation8 [shape = 'u8[8192]{0}', space=vmem, size = 0x2000, scoped, tag = 'output window, operand 0, single buffered']
    #allocation9 [shape = 'u8[8192]{0}', space=vmem, size = 0x2000, scoped, tag = 'output window, operand 1, single buffered']
    #allocation10 [shape = 's32[1]{0}', space=sflag, size = 0x4, scoped, tag = 'scoped memory for self_attention_forward.1']
    %12 = vsyncpa [#allocation3], 0
    %13 = vsyncpa [#allocation6], 0
    %14 = vsyncpa [#allocation4], 0
    %15 = vsyncpa [#allocation10], 0
    // Predicated region
    $region2: #{self_attention_forward.1} parent=1 // pred_check
      _
    $region3: #{self_attention_forward.1} parent=1 // pred_check_branch
      %17 = sbr.rel (0) target = $region5
    $region4: #{self_attention_forward.1} parent=1 // pred_region
      _
    $region5: #{self_attention_forward.1} parent=1 // pred_fallthru
      _
    // Predicated region
    $region6: #{self_attention_forward.1} parent=1 // pred_check
      _
    $region7: #{self_attention_forward.1} parent=1 // pred_check_branch
      %19 = sbr.rel (0) target = $region9
    $region8: #{self_attention_forward.1} parent=1 // pred_region
      %s21 = ssub.s32 256, 256
      %22 = vsyncadd [#allocation3], %s21
      %s23 = sshll.u32 [#allocation2], 4
      %s24 = int_to_ptr.vmem [resolvable:$true] %s23
      %29 = dma.hbm_to_vmem [thread:$0]  %s1, 256, %s24, [#allocation3], 128, 128, 8
    $region9: #{self_attention_forward.1} parent=1 // pred_fallthru
      _
    // Predicated region
    $region10: #{self_attention_forward.1} parent=1 // pred_check
      _
    $region11: #{self_attention_forward.1} parent=1 // pred_check_branch
      %31 = sbr.rel (0) target = $region13
    $region12: #{self_attention_forward.1} parent=1 // pred_region
      %s33 = ssub.s32 256, 256
      %34 = vsyncadd [#allocation6], %s33
      %s35 = sshll.u32 [#allocation5], 4
      %s36 = int_to_ptr.vmem [resolvable:$true] %s35
      %41 = dma.hbm_to_vmem [thread:$0]  %s2, 256, %s36, [#allocation6], 128, 128, 8
    $region13: #{self_attention_forward.1} parent=1 // pred_fallthru
      _
    // Predicated region
    $region14: #{self_attention_forward.1} parent=1 // pred_check
      _
    $region15: #{self_attention_forward.1} parent=1 // pred_check_branch
      %43 = sbr.rel (0) target = $region17
    $region16: #{self_attention_forward.1} parent=1 // pred_region
      %s45 = ssub.s32 256, 256
      %46 = vsyncadd [#allocation6], %s45
      %s47 = sshll.u32 [#allocation7], 4
      %s48 = int_to_ptr.vmem [resolvable:$true] %s47
      %53 = dma.hbm_to_vmem [thread:$0]  %s3, 256, %s48, [#allocation6], 64, 64, 4
    $region17: #{self_attention_forward.1} parent=1 // pred_fallthru
      _
    // Predicated region
    $region18: #{self_attention_forward.1} parent=1 // pred_check
      _
    $region19: #{self_attention_forward.1} parent=1 // pred_check_branch
      %55 = sbr.rel (0) target = $region21
    $region20: #{self_attention_forward.1} parent=1 // pred_region
      _
    $region21: #{self_attention_forward.1} parent=1 // pred_fallthru
      _
    // Predicated region
    $region22: #{self_attention_forward.1} parent=1 // pred_check
      _
    $region23: #{self_attention_forward.1} parent=1 // pred_check_branch
      %57 = sbr.rel (0) target = $region25
    $region24: #{self_attention_forward.1} parent=1 // pred_region
      %58 = dma.done [#allocation3], 256
    $region25: #{self_attention_forward.1} parent=1 // pred_fallthru
      _
    // Predicated region
    $region26: #{self_attention_forward.1} parent=1 // pred_check
      _
    $region27: #{self_attention_forward.1} parent=1 // pred_check_branch
      %60 = sbr.rel (0) target = $region29
    $region28: #{self_attention_forward.1} parent=1 // pred_region
      %61 = dma.done [#allocation6], 256
    $region29: #{self_attention_forward.1} parent=1 // pred_fallthru
      _
    // Predicated region
    $region30: #{self_attention_forward.1} parent=1 // pred_check
      _
    $region31: #{self_attention_forward.1} parent=1 // pred_check_branch
      %63 = sbr.rel (0) target = $region33
    $region32: #{self_attention_forward.1} parent=1 // pred_region
      %64 = dma.done [#allocation6], 256
    $region33: #{self_attention_forward.1} parent=1 // pred_fallthru
      _
    %v66 = vld [vmem:[#allocation7] sm:$0xf]
    %v67 = vld [vmem:[#allocation7 + $0x4] sm:$0xf]
    %v68 = vld [vmem:[#allocation7 + $0x8] sm:$0xf]
    %v69 = vld [vmem:[#allocation7 + $0xc] sm:$0xf]
    %v70 = vld [vmem:[%s4] sm:$0x3f]
    %v71 = vld [vmem:[%s0] sm:$0xff]
    %v72 = vld [vmem:[%s0 + $0x8] sm:$0xff]
    %v73 = vld [vmem:[#allocation2] sm:$0xff]
    %v74 = vld [vmem:[#allocation2 + $0x8] sm:$0xff]
    %v75 = vld [vmem:[#allocation5] sm:$0xff]
    %v76 = vld [vmem:[#allocation5 + $0x8] sm:$0xff]
    %v77 = vpack.c.bf16 %v72, %v71
    %v78 = vlaneseq
    %v79 = vshrl.u32 %v78, 7
    %v80 = vsub.s32 0, %v79
    %v81 = vrot.slane %v70, %v80
    %v86 = vunpack.c.l.b16 %v66
    %v87 = vunpack.c.l.b16 %v67
    %v88 = vunpack.c.l.b16 %v68
    %v89 = vunpack.c.l.b16 %v69
    %v90 = vpack.c.b16 %v87, %v86
    %v91 = vpack.c.b16 %v89, %v88
    %vm94 = vcmask 261120
    %v96 = vsel %vm94, %v77, 0
    %98 = vmatprep.subr.bf16.mxu0 0
    %99 = vmatpush1.bf16.msra.mxu0 %v90
    %100 = vmatprep.subr.bf16.mxu0 0
    %101 = vmatpush1.bf16.msra.mxu0 %v91
    %102 = vmatprep.subr.bf16.mxu0 0
    %103 = vmatpush1.bf16.msra.mxu0 0
    %104 = vmatprep.subr.bf16.mxu0 0
    %105 = vmatpush1.bf16.msra.mxu0 0
    %106 = vmatprep.subr.bf16.mxu0 0
    %107 = vmatpush1.bf16.msra.mxu0 0
    %108 = vmatprep.subr.bf16.mxu0 0
    %109 = vmatpush1.bf16.msra.mxu0 0
    %110 = vmatprep.subr.bf16.mxu0 0
    %111 = vmatpush1.bf16.msra.mxu0 0
    %112 = vmatprep.subr.bf16.mxu0 0
    %113 = vmatpush1.bf16.msra.mxu0 0
    %114 = vmatprep.subr.bf16.mxu0 0
    %115 = vmatpush1.bf16.msra.mxu0 0
    %116 = vmatprep.subr.bf16.mxu0 0
    %117 = vmatpush1.bf16.msra.mxu0 0
    %118 = vmatprep.subr.bf16.mxu0 0
    %119 = vmatpush1.bf16.msra.mxu0 0
    %120 = vmatprep.subr.bf16.mxu0 0
    %121 = vmatpush1.bf16.msra.mxu0 0
    %122 = vmatprep.subr.bf16.mxu0 0
    %123 = vmatpush1.bf16.msra.mxu0 0
    %124 = vmatprep.subr.bf16.mxu0 0
    %125 = vmatpush1.bf16.msra.mxu0 0
    %126 = vmatprep.subr.bf16.mxu0 0
    %127 = vmatpush1.bf16.msra.mxu0 0
    %128 = vmatprep.subr.bf16.mxu0 0
    %129 = vmatpush1.bf16.msra.mxu0 0
    %130 = vmatprep.mubr.bf16.mxu0 0
    %131 = vmatmul.mubr.bf16.gmra.mrb[0].mxu0 %v96
    %v132 = vpop.f32.mrb[0].mxu0
    %v133 = vadd.f32 %v81, %v132
    %v134 = vpop.f32.mrb[0].mxu0
    %v135 = vpop.f32.mrb[0].mxu0
    %v136 = vadd.f32 %v81, %v135
    %v137 = vpop.f32.mrb[0].mxu0
    %138 = vdwg.mxu0
    %v139 = vpack.c.bf16 %v74, %v73
    %v140 = vlaneseq
    %v141 = vshrl.u32 %v140, 7
    %v142 = vsub.s32 1, %v141
    %v143 = vrot.slane %v70, %v142
    %144 = vrot.lane.b32.xlu0 %v90, 96
    %v145 = vpop.permute.xlu0 %144
    %146 = vrot.lane.b32.xlu0 %v91, 96
    %v147 = vpop.permute.xlu0 %146
    %v151 = vsel %vm94, %v139, 0
    %153 = vmatprep.subr.bf16.mxu0 0
    %154 = vmatpush1.bf16.msra.mxu0 %v145
    %155 = vmatprep.subr.bf16.mxu0 0
    %156 = vmatpush1.bf16.msra.mxu0 %v147
    %157 = vmatprep.subr.bf16.mxu0 0
    %158 = vmatpush1.bf16.msra.mxu0 0
    %159 = vmatprep.subr.bf16.mxu0 0
    %160 = vmatpush1.bf16.msra.mxu0 0
    %161 = vmatprep.subr.bf16.mxu0 0
    %162 = vmatpush1.bf16.msra.mxu0 0
    %163 = vmatprep.subr.bf16.mxu0 0
    %164 = vmatpush1.bf16.msra.mxu0 0
    %165 = vmatprep.subr.bf16.mxu0 0
    %166 = vmatpush1.bf16.msra.mxu0 0
    %167 = vmatprep.subr.bf16.mxu0 0
    %168 = vmatpush1.bf16.msra.mxu0 0
    %169 = vmatprep.subr.bf16.mxu0 0
    %170 = vmatpush1.bf16.msra.mxu0 0
    %171 = vmatprep.subr.bf16.mxu0 0
    %172 = vmatpush1.bf16.msra.mxu0 0
    %173 = vmatprep.subr.bf16.mxu0 0
    %174 = vmatpush1.bf16.msra.mxu0 0
    %175 = vmatprep.subr.bf16.mxu0 0
    %176 = vmatpush1.bf16.msra.mxu0 0
    %177 = vmatprep.subr.bf16.mxu0 0
    %178 = vmatpush1.bf16.msra.mxu0 0
    %179 = vmatprep.subr.bf16.mxu0 0
    %180 = vmatpush1.bf16.msra.mxu0 0
    %181 = vmatprep.subr.bf16.mxu0 0
    %182 = vmatpush1.bf16.msra.mxu0 0
    %183 = vmatprep.subr.bf16.mxu0 0
    %184 = vmatpush1.bf16.msra.mxu0 0
    %185 = vmatprep.mubr.bf16.mxu0 0
    %186 = vmatmul.mubr.bf16.gmra.mrb[0].mxu0 %v151
    %v187 = vpop.f32.mrb[0].mxu0
    %v188 = vadd.f32 %v143, %v187
    %v189 = vpop.f32.mrb[0].mxu0
    %v190 = vpop.f32.mrb[0].mxu0
    %v191 = vadd.f32 %v143, %v190
    %v192 = vpop.f32.mrb[0].mxu0
    %193 = vdwg.mxu0
    %v194 = vpack.c.bf16 %v76, %v75
    %v195 = vlaneseq
    %v196 = vshrl.u32 %v195, 7
    %v197 = vsub.s32 2, %v196
    %v198 = vrot.slane %v70, %v197
    %199 = vrot.lane.b32.xlu0 %v90, 64
    %v200 = vpop.permute.xlu0 %199
    %201 = vrot.lane.b32.xlu0 %v91, 64
    %v202 = vpop.permute.xlu0 %201
    %v206 = vsel %vm94, %v194, 0
    %208 = vmatprep.subr.bf16.mxu0 0
    %209 = vmatpush1.bf16.msra.mxu0 %v200
    %210 = vmatprep.subr.bf16.mxu0 0
    %211 = vmatpush1.bf16.msra.mxu0 %v202
    %212 = vmatprep.subr.bf16.mxu0 0
    %213 = vmatpush1.bf16.msra.mxu0 0
    %214 = vmatprep.subr.bf16.mxu0 0
    %215 = vmatpush1.bf16.msra.mxu0 0
    %216 = vmatprep.subr.bf16.mxu0 0
    %217 = vmatpush1.bf16.msra.mxu0 0
    %218 = vmatprep.subr.bf16.mxu0 0
    %219 = vmatpush1.bf16.msra.mxu0 0
    %220 = vmatprep.subr.bf16.mxu0 0
    %221 = vmatpush1.bf16.msra.mxu0 0
    %222 = vmatprep.subr.bf16.mxu0 0
    %223 = vmatpush1.bf16.msra.mxu0 0
    %224 = vmatprep.subr.bf16.mxu0 0
    %225 = vmatpush1.bf16.msra.mxu0 0
    %226 = vmatprep.subr.bf16.mxu0 0
    %227 = vmatpush1.bf16.msra.mxu0 0
    %228 = vmatprep.subr.bf16.mxu0 0
    %229 = vmatpush1.bf16.msra.mxu0 0
    %230 = vmatprep.subr.bf16.mxu0 0
    %231 = vmatpush1.bf16.msra.mxu0 0
    %232 = vmatprep.subr.bf16.mxu0 0
    %233 = vmatpush1.bf16.msra.mxu0 0
    %234 = vmatprep.subr.bf16.mxu0 0
    %235 = vmatpush1.bf16.msra.mxu0 0
    %236 = vmatprep.subr.bf16.mxu0 0
    %237 = vmatpush1.bf16.msra.mxu0 0
    %238 = vmatprep.subr.bf16.mxu0 0
    %239 = vmatpush1.bf16.msra.mxu0 0
    %240 = vmatprep.mubr.bf16.mxu0 0
    %241 = vmatmul.mubr.bf16.gmra.mrb[0].mxu0 %v206
    %v242 = vpop.f32.mrb[0].mxu0
    %v243 = vadd.f32 %v198, %v242
    %v244 = vpop.f32.mrb[0].mxu0
    %v245 = vpop.f32.mrb[0].mxu0
    %v246 = vadd.f32 %v198, %v245
    %v247 = vpop.f32.mrb[0].mxu0
    %248 = vdwg.mxu0
    %v249 = vpack.c.bf16 %v136, %v133
    %v250 = vpack.c.bf16 %v191, %v188
    %v251 = vpack.c.bf16 %v246, %v243
    %v252 = vlaneseq
    %v253 = vshrl.u32 %v252, 7
    %v254 = vadd.s32 %v253, 8
    %v255 = vlaneseq
    %v256 = vand.u32 %v255, 127
    %v257 = vand.u32 %v253, 1
    %v258 = vand.u32 %v254, 1
    %v259 = vand.u32 %v256, 1
    %vm260 = vcmp.eq.s32.totalorder %v257, %v259
    %vm261 = vcmp.eq.s32.totalorder %v258, %v259
    %vm262 = vcmask 64512
    %v264 = vsel %vm262, %v249, 0
    %v267 = vsel %vm262, %v250, 0
    %269 = vmatprep.subr.bf16.mxu0 0
    %270 = vmatpush1.bf16.xpose.msra.mxu0 %v267
    %271 = vmatprep.subr.bf16.mxu0 0
    %272 = vmatpush1.bf16.xpose.msra.mxu0 0
    %273 = vmatprep.subr.bf16.mxu0 0
    %274 = vmatpush1.bf16.xpose.msra.mxu0 0
    %275 = vmatprep.subr.bf16.mxu0 0
    %276 = vmatpush1.bf16.xpose.msra.mxu0 0
    %277 = vmatprep.subr.bf16.mxu0 0
    %278 = vmatpush1.bf16.xpose.msra.mxu0 0
    %279 = vmatprep.subr.bf16.mxu0 0
    %280 = vmatpush1.bf16.xpose.msra.mxu0 0
    %281 = vmatprep.subr.bf16.mxu0 0
    %282 = vmatpush1.bf16.xpose.msra.mxu0 0
    %283 = vmatprep.subr.bf16.mxu0 0
    %284 = vmatpush1.bf16.xpose.msra.mxu0 0
    %285 = vmatprep.subr.bf16.mxu0 0
    %286 = vmatpush1.bf16.xpose.msra.mxu0 0
    %287 = vmatprep.subr.bf16.mxu0 0
    %288 = vmatpush1.bf16.xpose.msra.mxu0 0
    %289 = vmatprep.subr.bf16.mxu0 0
    %290 = vmatpush1.bf16.xpose.msra.mxu0 0
    %291 = vmatprep.subr.bf16.mxu0 0
    %292 = vmatpush1.bf16.xpose.msra.mxu0 0
    %293 = vmatprep.subr.bf16.mxu0 0
    %294 = vmatpush1.bf16.xpose.msra.mxu0 0
    %295 = vmatprep.subr.bf16.mxu0 0
    %296 = vmatpush1.bf16.xpose.msra.mxu0 0
    %297 = vmatprep.subr.bf16.mxu0 0
    %298 = vmatpush1.bf16.xpose.msra.mxu0 0
    %299 = vmatprep.subr.bf16.mxu0 0
    %300 = vmatpush1.bf16.xpose.msra.mxu0 0
    %301 = vmatprep.mubr.bf16.mxu0 0
    %302 = vmatmul.mubr.bf16.gmra.mrb[0].mxu0 %v264
    %v303 = vpop.f32.mrb[0].mxu0
    %v304 = vadd.f32 0.0, %v303
    %v305 = vpop.f32.mrb[0].mxu0
    %v306 = vpop.f32.mrb[0].mxu0
    %v307 = vadd.f32 0.0, %v306
    %v308 = vpop.f32.mrb[0].mxu0
    %309 = vdwg.mxu0
    %v310 = vmul.f32 %v304, 0.35355338
    %v311 = vmul.f32 %v307, 0.35355338
    %v312 = vsel %vm260, %v310, -1e+30
    %v313 = vsel %vm261, %v311, -1e+30
    %vm314 = vcmask 130048
    %v315 = vsel %vm314, %v312, -inf
    %316 = vmax.xlane.f32.xlu0 %v315
    %v317 = vpop.xlane.xlu0 %316
    %v318 = vsel %vm314, %v313, -inf
    %319 = vmax.xlane.f32.xlu0 %v318
    %v320 = vpop.xlane.xlu0 %319
    %v321 = vsub.f32 %v312, %v317
    %v322 = vsub.f32 %v313, %v320
    %v323 = vmul.f32 %v321, 1.442695
    %v324 = vpow.pop %v323
    %v325 = vmul.f32 %v322, 1.442695
    %v326 = vpow.pop %v325
    %v327 = vsel %vm314, %v324, 0.0
    %328 = vadd.xlane.f32.xlu0 %v327
    %v329 = vpop.xlane.xlu0 %328
    %v330 = vsel %vm314, %v326, 0.0
    %331 = vadd.xlane.f32.xlu0 %v330
    %v332 = vpop.xlane.xlu0 %331
    %v333 = vrcp.pop %v329
    %v334 = vrcp.pop %v332
    %v335 = vmul.f32 %v324, %v333
    %v336 = vmul.f32 %v326, %v334
    %v337 = vadd.f32 %v335, 0.0
    %v338 = vadd.f32 %v336, 0.0
    %v339 = vpack.c.bf16 %v336, %v335
    %v341 = vsel %vm314, %v339, 0
    %343 = vmatprep.subr.bf16.mxu0 0
    %344 = vmatpush1.bf16.msra.mxu0 %v251
    %345 = vmatprep.subr.bf16.mxu0 0
    %346 = vmatpush1.bf16.msra.mxu0 0
    %347 = vmatprep.subr.bf16.mxu0 0
    %348 = vmatpush1.bf16.msra.mxu0 0
    %349 = vmatprep.subr.bf16.mxu0 0
    %350 = vmatpush1.bf16.msra.mxu0 0
    %351 = vmatprep.subr.bf16.mxu0 0
    %352 = vmatpush1.bf16.msra.mxu0 0
    %353 = vmatprep.subr.bf16.mxu0 0
    %354 = vmatpush1.bf16.msra.mxu0 0
    %355 = vmatprep.subr.bf16.mxu0 0
    %356 = vmatpush1.bf16.msra.mxu0 0
    %357 = vmatprep.subr.bf16.mxu0 0
    %358 = vmatpush1.bf16.msra.mxu0 0
    %359 = vmatprep.subr.bf16.mxu0 0
    %360 = vmatpush1.bf16.msra.mxu0 0
    %361 = vmatprep.subr.bf16.mxu0 0
    %362 = vmatpush1.bf16.msra.mxu0 0
    %363 = vmatprep.subr.bf16.mxu0 0
    %364 = vmatpush1.bf16.msra.mxu0 0
    %365 = vmatprep.subr.bf16.mxu0 0
    %366 = vmatpush1.bf16.msra.mxu0 0
    %367 = vmatprep.subr.bf16.mxu0 0
    %368 = vmatpush1.bf16.msra.mxu0 0
    %369 = vmatprep.subr.bf16.mxu0 0
    %370 = vmatpush1.bf16.msra.mxu0 0
    %371 = vmatprep.subr.bf16.mxu0 0
    %372 = vmatpush1.bf16.msra.mxu0 0
    %373 = vmatprep.subr.bf16.mxu0 0
    %374 = vmatpush1.bf16.msra.mxu0 0
    %375 = vmatprep.mubr.bf16.mxu0 0
    %376 = vmatmul.mubr.bf16.gmra.mrb[0].mxu0 %v341
    %v377 = vpop.f32.mrb[0].mxu0
    %v378 = vadd.f32 0.0, %v377
    %v379 = vpop.f32.mrb[0].mxu0
    %v380 = vpop.f32.mrb[0].mxu0
    %v381 = vadd.f32 0.0, %v380
    %v382 = vpop.f32.mrb[0].mxu0
    %383 = vdwg.mxu0
    %385 = vrot.lane.b32.xlu0 %v249, 120
    %v386 = vpop.permute.xlu0 %385
    %388 = vrot.lane.b32.xlu0 %v250, 120
    %v389 = vpop.permute.xlu0 %388
    %v391 = vsel %vm262, %v386, 0
    %v394 = vsel %vm262, %v389, 0
    %396 = vmatprep.subr.bf16.mxu0 0
    %397 = vmatpush1.bf16.xpose.msra.mxu0 %v394
    %398 = vmatprep.subr.bf16.mxu0 0
    %399 = vmatpush1.bf16.xpose.msra.mxu0 0
    %400 = vmatprep.subr.bf16.mxu0 0
    %401 = vmatpush1.bf16.xpose.msra.mxu0 0
    %402 = vmatprep.subr.bf16.mxu0 0
    %403 = vmatpush1.bf16.xpose.msra.mxu0 0
    %404 = vmatprep.subr.bf16.mxu0 0
    %405 = vmatpush1.bf16.xpose.msra.mxu0 0
    %406 = vmatprep.subr.bf16.mxu0 0
    %407 = vmatpush1.bf16.xpose.msra.mxu0 0
    %408 = vmatprep.subr.bf16.mxu0 0
    %409 = vmatpush1.bf16.xpose.msra.mxu0 0
    %410 = vmatprep.subr.bf16.mxu0 0
    %411 = vmatpush1.bf16.xpose.msra.mxu0 0
    %412 = vmatprep.subr.bf16.mxu0 0
    %413 = vmatpush1.bf16.xpose.msra.mxu0 0
    %414 = vmatprep.subr.bf16.mxu0 0
    %415 = vmatpush1.bf16.xpose.msra.mxu0 0
    %416 = vmatprep.subr.bf16.mxu0 0
    %417 = vmatpush1.bf16.xpose.msra.mxu0 0
    %418 = vmatprep.subr.bf16.mxu0 0
    %419 = vmatpush1.bf16.xpose.msra.mxu0 0
    %420 = vmatprep.subr.bf16.mxu0 0
    %421 = vmatpush1.bf16.xpose.msra.mxu0 0
    %422 = vmatprep.subr.bf16.mxu0 0
    %423 = vmatpush1.bf16.xpose.msra.mxu0 0
    %424 = vmatprep.subr.bf16.mxu0 0
    %425 = vmatpush1.bf16.xpose.msra.mxu0 0
    %426 = vmatprep.subr.bf16.mxu0 0
    %427 = vmatpush1.bf16.xpose.msra.mxu0 0
    %428 = vmatprep.mubr.bf16.mxu0 0
    %429 = vmatmul.mubr.bf16.gmra.mrb[0].mxu0 %v391
    %v430 = vpop.f32.mrb[0].mxu0
    %v431 = vadd.f32 0.0, %v430
    %v432 = vpop.f32.mrb[0].mxu0
    %v433 = vpop.f32.mrb[0].mxu0
    %v434 = vadd.f32 0.0, %v433
    %v435 = vpop.f32.mrb[0].mxu0
    %436 = vdwg.mxu0
    %v437 = vmul.f32 %v431, 0.35355338
    %v438 = vmul.f32 %v434, 0.35355338
    %v439 = vsel %vm260, %v437, -1e+30
    %v440 = vsel %vm261, %v438, -1e+30
    %v441 = vsel %vm314, %v439, -inf
    %442 = vmax.xlane.f32.xlu0 %v441
    %v443 = vpop.xlane.xlu0 %442
    %v444 = vsel %vm314, %v440, -inf
    %445 = vmax.xlane.f32.xlu0 %v444
    %v446 = vpop.xlane.xlu0 %445
    %v447 = vsub.f32 %v439, %v443
    %v448 = vsub.f32 %v440, %v446
    %v449 = vmul.f32 %v447, 1.442695
    %v450 = vpow.pop %v449
    %v451 = vmul.f32 %v448, 1.442695
    %v452 = vpow.pop %v451
    %v453 = vsel %vm314, %v450, 0.0
    %454 = vadd.xlane.f32.xlu0 %v453
    %v455 = vpop.xlane.xlu0 %454
    %v456 = vsel %vm314, %v452, 0.0
    %457 = vadd.xlane.f32.xlu0 %v456
    %v458 = vpop.xlane.xlu0 %457
    %v459 = vrcp.pop %v455
    %v460 = vrcp.pop %v458
    %v461 = vmul.f32 %v450, %v459
    %v462 = vmul.f32 %v452, %v460
    %v463 = vadd.f32 %v337, %v461
    %v464 = vadd.f32 %v338, %v462
    %v465 = vpack.c.bf16 %v462, %v461
    %467 = vrot.lane.b32.xlu0 %v251, 120
    %v468 = vpop.permute.xlu0 %467
    %v471 = vsel %vm314, %v465, 0
    %473 = vmatprep.subr.bf16.mxu0 0
    %474 = vmatpush1.bf16.msra.mxu0 %v468
    %475 = vmatprep.subr.bf16.mxu0 0
    %476 = vmatpush1.bf16.msra.mxu0 0
    %477 = vmatprep.subr.bf16.mxu0 0
    %478 = vmatpush1.bf16.msra.mxu0 0
    %479 = vmatprep.subr.bf16.mxu0 0
    %480 = vmatpush1.bf16.msra.mxu0 0
    %481 = vmatprep.subr.bf16.mxu0 0
    %482 = vmatpush1.bf16.msra.mxu0 0
    %483 = vmatprep.subr.bf16.mxu0 0
    %484 = vmatpush1.bf16.msra.mxu0 0
    %485 = vmatprep.subr.bf16.mxu0 0
    %486 = vmatpush1.bf16.msra.mxu0 0
    %487 = vmatprep.subr.bf16.mxu0 0
    %488 = vmatpush1.bf16.msra.mxu0 0
    %489 = vmatprep.subr.bf16.mxu0 0
    %490 = vmatpush1.bf16.msra.mxu0 0
    %491 = vmatprep.subr.bf16.mxu0 0
    %492 = vmatpush1.bf16.msra.mxu0 0
    %493 = vmatprep.subr.bf16.mxu0 0
    %494 = vmatpush1.bf16.msra.mxu0 0
    %495 = vmatprep.subr.bf16.mxu0 0
    %496 = vmatpush1.bf16.msra.mxu0 0
    %497 = vmatprep.subr.bf16.mxu0 0
    %498 = vmatpush1.bf16.msra.mxu0 0
    %499 = vmatprep.subr.bf16.mxu0 0
    %500 = vmatpush1.bf16.msra.mxu0 0
    %501 = vmatprep.subr.bf16.mxu0 0
    %502 = vmatpush1.bf16.msra.mxu0 0
    %503 = vmatprep.subr.bf16.mxu0 0
    %504 = vmatpush1.bf16.msra.mxu0 0
    %505 = vmatprep.mubr.bf16.mxu0 0
    %506 = vmatmul.mubr.bf16.gmra.mrb[0].mxu0 %v471
    %v507 = vpop.f32.mrb[0].mxu0
    %v508 = vadd.f32 0.0, %v507
    %v509 = vpop.f32.mrb[0].mxu0
    %v510 = vpop.f32.mrb[0].mxu0
    %v511 = vadd.f32 0.0, %v510
    %v512 = vpop.f32.mrb[0].mxu0
    %513 = vdwg.mxu0
    %514 = vrot.lane.b32.xlu0 %v249, 112
    %v515 = vpop.permute.xlu0 %514
    %516 = vrot.lane.b32.xlu0 %v250, 112
    %v517 = vpop.permute.xlu0 %516
    %v519 = vsel %vm262, %v515, 0
    %v522 = vsel %vm262, %v517, 0
    %524 = vmatprep.subr.bf16.mxu0 0
    %525 = vmatpush1.bf16.xpose.msra.mxu0 %v522
    %526 = vmatprep.subr.bf16.mxu0 0
    %527 = vmatpush1.bf16.xpose.msra.mxu0 0
    %528 = vmatprep.subr.bf16.mxu0 0
    %529 = vmatpush1.bf16.xpose.msra.mxu0 0
    %530 = vmatprep.subr.bf16.mxu0 0
    %531 = vmatpush1.bf16.xpose.msra.mxu0 0
    %532 = vmatprep.subr.bf16.mxu0 0
    %533 = vmatpush1.bf16.xpose.msra.mxu0 0
    %534 = vmatprep.subr.bf16.mxu0 0
    %535 = vmatpush1.bf16.xpose.msra.mxu0 0
    %536 = vmatprep.subr.bf16.mxu0 0
    %537 = vmatpush1.bf16.xpose.msra.mxu0 0
    %538 = vmatprep.subr.bf16.mxu0 0
    %539 = vmatpush1.bf16.xpose.msra.mxu0 0
    %540 = vmatprep.subr.bf16.mxu0 0
    %541 = vmatpush1.bf16.xpose.msra.mxu0 0
    %542 = vmatprep.subr.bf16.mxu0 0
    %543 = vmatpush1.bf16.xpose.msra.mxu0 0
    %544 = vmatprep.subr.bf16.mxu0 0
    %545 = vmatpush1.bf16.xpose.msra.mxu0 0
    %546 = vmatprep.subr.bf16.mxu0 0
    %547 = vmatpush1.bf16.xpose.msra.mxu0 0
    %548 = vmatprep.subr.bf16.mxu0 0
    %549 = vmatpush1.bf16.xpose.msra.mxu0 0
    %550 = vmatprep.subr.bf16.mxu0 0
    %551 = vmatpush1.bf16.xpose.msra.mxu0 0
    %552 = vmatprep.subr.bf16.mxu0 0
    %553 = vmatpush1.bf16.xpose.msra.mxu0 0
    %554 = vmatprep.subr.bf16.mxu0 0
    %555 = vmatpush1.bf16.xpose.msra.mxu0 0
    %556 = vmatprep.mubr.bf16.mxu0 0
    %557 = vmatmul.mubr.bf16.gmra.mrb[0].mxu0 %v519
    %v558 = vpop.f32.mrb[0].mxu0
    %v559 = vadd.f32 0.0, %v558
    %v560 = vpop.f32.mrb[0].mxu0
    %v561 = vpop.f32.mrb[0].mxu0
    %v562 = vadd.f32 0.0, %v561
    %v563 = vpop.f32.mrb[0].mxu0
    %564 = vdwg.mxu0
    %v565 = vmul.f32 %v559, 0.35355338
    %v566 = vmul.f32 %v562, 0.35355338
    %v567 = vsel %vm260, %v565, -1e+30
    %v568 = vsel %vm261, %v566, -1e+30
    %v569 = vsel %vm314, %v567, -inf
    %570 = vmax.xlane.f32.xlu0 %v569
    %v571 = vpop.xlane.xlu0 %570
    %v572 = vsel %vm314, %v568, -inf
    %573 = vmax.xlane.f32.xlu0 %v572
    %v574 = vpop.xlane.xlu0 %573
    %v575 = vsub.f32 %v567, %v571
    %v576 = vsub.f32 %v568, %v574
    %v577 = vmul.f32 %v575, 1.442695
    %v578 = vpow.pop %v577
    %v579 = vmul.f32 %v576, 1.442695
    %v580 = vpow.pop %v579
    %v581 = vsel %vm314, %v578, 0.0
    %582 = vadd.xlane.f32.xlu0 %v581
    %v583 = vpop.xlane.xlu0 %582
    %v584 = vsel %vm314, %v580, 0.0
    %585 = vadd.xlane.f32.xlu0 %v584
    %v586 = vpop.xlane.xlu0 %585
    %v587 = vrcp.pop %v583
    %v588 = vrcp.pop %v586
    %v589 = vmul.f32 %v578, %v587
    %v590 = vmul.f32 %v580, %v588
    %v591 = vadd.f32 %v463, %v589
    %v592 = vadd.f32 %v464, %v590
    %v593 = vpack.c.bf16 %v590, %v589
    %594 = vrot.lane.b32.xlu0 %v251, 112
    %v595 = vpop.permute.xlu0 %594
    %v598 = vsel %vm314, %v593, 0
    %600 = vmatprep.subr.bf16.mxu0 0
    %601 = vmatpush1.bf16.msra.mxu0 %v595
    %602 = vmatprep.subr.bf16.mxu0 0
    %603 = vmatpush1.bf16.msra.mxu0 0
    %604 = vmatprep.subr.bf16.mxu0 0
    %605 = vmatpush1.bf16.msra.mxu0 0
    %606 = vmatprep.subr.bf16.mxu0 0
    %607 = vmatpush1.bf16.msra.mxu0 0
    %608 = vmatprep.subr.bf16.mxu0 0
    %609 = vmatpush1.bf16.msra.mxu0 0
    %610 = vmatprep.subr.bf16.mxu0 0
    %611 = vmatpush1.bf16.msra.mxu0 0
    %612 = vmatprep.subr.bf16.mxu0 0
    %613 = vmatpush1.bf16.msra.mxu0 0
    %614 = vmatprep.subr.bf16.mxu0 0
    %615 = vmatpush1.bf16.msra.mxu0 0
    %616 = vmatprep.subr.bf16.mxu0 0
    %617 = vmatpush1.bf16.msra.mxu0 0
    %618 = vmatprep.subr.bf16.mxu0 0
    %619 = vmatpush1.bf16.msra.mxu0 0
    %620 = vmatprep.subr.bf16.mxu0 0
    %621 = vmatpush1.bf16.msra.mxu0 0
    %622 = vmatprep.subr.bf16.mxu0 0
    %623 = vmatpush1.bf16.msra.mxu0 0
    %624 = vmatprep.subr.bf16.mxu0 0
    %625 = vmatpush1.bf16.msra.mxu0 0
    %626 = vmatprep.subr.bf16.mxu0 0
    %627 = vmatpush1.bf16.msra.mxu0 0
    %628 = vmatprep.subr.bf16.mxu0 0
    %629 = vmatpush1.bf16.msra.mxu0 0
    %630 = vmatprep.subr.bf16.mxu0 0
    %631 = vmatpush1.bf16.msra.mxu0 0
    %632 = vmatprep.mubr.bf16.mxu0 0
    %633 = vmatmul.mubr.bf16.gmra.mrb[0].mxu0 %v598
    %v634 = vpop.f32.mrb[0].mxu0
    %v635 = vadd.f32 0.0, %v634
    %v636 = vpop.f32.mrb[0].mxu0
    %v637 = vpop.f32.mrb[0].mxu0
    %v638 = vadd.f32 0.0, %v637
    %v639 = vpop.f32.mrb[0].mxu0
    %640 = vdwg.mxu0
    %641 = vrot.lane.b32.xlu0 %v249, 104
    %v642 = vpop.permute.xlu0 %641
    %643 = vrot.lane.b32.xlu0 %v250, 104
    %v644 = vpop.permute.xlu0 %643
    %v646 = vsel %vm262, %v642, 0
    %v649 = vsel %vm262, %v644, 0
    %651 = vmatprep.subr.bf16.mxu0 0
    %652 = vmatpush1.bf16.xpose.msra.mxu0 %v649
    %653 = vmatprep.subr.bf16.mxu0 0
    %654 = vmatpush1.bf16.xpose.msra.mxu0 0
    %655 = vmatprep.subr.bf16.mxu0 0
    %656 = vmatpush1.bf16.xpose.msra.mxu0 0
    %657 = vmatprep.subr.bf16.mxu0 0
    %658 = vmatpush1.bf16.xpose.msra.mxu0 0
    %659 = vmatprep.subr.bf16.mxu0 0
    %660 = vmatpush1.bf16.xpose.msra.mxu0 0
    %661 = vmatprep.subr.bf16.mxu0 0
    %662 = vmatpush1.bf16.xpose.msra.mxu0 0
    %663 = vmatprep.subr.bf16.mxu0 0
    %664 = vmatpush1.bf16.xpose.msra.mxu0 0
    %665 = vmatprep.subr.bf16.mxu0 0
    %666 = vmatpush1.bf16.xpose.msra.mxu0 0
    %667 = vmatprep.subr.bf16.mxu0 0
    %668 = vmatpush1.bf16.xpose.msra.mxu0 0
    %669 = vmatprep.subr.bf16.mxu0 0
    %670 = vmatpush1.bf16.xpose.msra.mxu0 0
    %671 = vmatprep.subr.bf16.mxu0 0
    %672 = vmatpush1.bf16.xpose.msra.mxu0 0
    %673 = vmatprep.subr.bf16.mxu0 0
    %674 = vmatpush1.bf16.xpose.msra.mxu0 0
    %675 = vmatprep.subr.bf16.mxu0 0
    %676 = vmatpush1.bf16.xpose.msra.mxu0 0
    %677 = vmatprep.subr.bf16.mxu0 0
    %678 = vmatpush1.bf16.xpose.msra.mxu0 0
    %679 = vmatprep.subr.bf16.mxu0 0
    %680 = vmatpush1.bf16.xpose.msra.mxu0 0
    %681 = vmatprep.subr.bf16.mxu0 0
    %682 = vmatpush1.bf16.xpose.msra.mxu0 0
    %683 = vmatprep.mubr.bf16.mxu0 0
    %684 = vmatmul.mubr.bf16.gmra.mrb[0].mxu0 %v646
    %v685 = vpop.f32.mrb[0].mxu0
    %v686 = vadd.f32 0.0, %v685
    %v687 = vpop.f32.mrb[0].mxu0
    %v688 = vpop.f32.mrb[0].mxu0
    %v689 = vadd.f32 0.0, %v688
    %v690 = vpop.f32.mrb[0].mxu0
    %691 = vdwg.mxu0
    %v692 = vmul.f32 %v686, 0.35355338
    %v693 = vmul.f32 %v689, 0.35355338
    %v694 = vsel %vm260, %v692, -1e+30
    %v695 = vsel %vm261, %v693, -1e+30
    %v696 = vsel %vm314, %v694, -inf
    %697 = vmax.xlane.f32.xlu0 %v696
    %v698 = vpop.xlane.xlu0 %697
    %v699 = vsel %vm314, %v695, -inf
    %700 = vmax.xlane.f32.xlu0 %v699
    %v701 = vpop.xlane.xlu0 %700
    %v702 = vsub.f32 %v694, %v698
    %v703 = vsub.f32 %v695, %v701
    %v704 = vmul.f32 %v702, 1.442695
    %v705 = vpow.pop %v704
    %v706 = vmul.f32 %v703, 1.442695
    %v707 = vpow.pop %v706
    %v708 = vsel %vm314, %v705, 0.0
    %709 = vadd.xlane.f32.xlu0 %v708
    %v710 = vpop.xlane.xlu0 %709
    %v711 = vsel %vm314, %v707, 0.0
    %712 = vadd.xlane.f32.xlu0 %v711
    %v713 = vpop.xlane.xlu0 %712
    %v714 = vrcp.pop %v710
    %v715 = vrcp.pop %v713
    %v716 = vmul.f32 %v705, %v714
    %v717 = vmul.f32 %v707, %v715
    %v718 = vadd.f32 %v591, %v716
    %v719 = vadd.f32 %v592, %v717
    %v720 = vpack.c.bf16 %v717, %v716
    %721 = vrot.lane.b32.xlu0 %v251, 104
    %v722 = vpop.permute.xlu0 %721
    %v725 = vsel %vm314, %v720, 0
    %727 = vmatprep.subr.bf16.mxu0 0
    %728 = vmatpush1.bf16.msra.mxu0 %v722
    %729 = vmatprep.subr.bf16.mxu0 0
    %730 = vmatpush1.bf16.msra.mxu0 0
    %731 = vmatprep.subr.bf16.mxu0 0
    %732 = vmatpush1.bf16.msra.mxu0 0
    %733 = vmatprep.subr.bf16.mxu0 0
    %734 = vmatpush1.bf16.msra.mxu0 0
    %735 = vmatprep.subr.bf16.mxu0 0
    %736 = vmatpush1.bf16.msra.mxu0 0
    %737 = vmatprep.subr.bf16.mxu0 0
    %738 = vmatpush1.bf16.msra.mxu0 0
    %739 = vmatprep.subr.bf16.mxu0 0
    %740 = vmatpush1.bf16.msra.mxu0 0
    %741 = vmatprep.subr.bf16.mxu0 0
    %742 = vmatpush1.bf16.msra.mxu0 0
    %743 = vmatprep.subr.bf16.mxu0 0
    %744 = vmatpush1.bf16.msra.mxu0 0
    %745 = vmatprep.subr.bf16.mxu0 0
    %746 = vmatpush1.bf16.msra.mxu0 0
    %747 = vmatprep.subr.bf16.mxu0 0
    %748 = vmatpush1.bf16.msra.mxu0 0
    %749 = vmatprep.subr.bf16.mxu0 0
    %750 = vmatpush1.bf16.msra.mxu0 0
    %751 = vmatprep.subr.bf16.mxu0 0
    %752 = vmatpush1.bf16.msra.mxu0 0
    %753 = vmatprep.subr.bf16.mxu0 0
    %754 = vmatpush1.bf16.msra.mxu0 0
    %755 = vmatprep.subr.bf16.mxu0 0
    %756 = vmatpush1.bf16.msra.mxu0 0
    %757 = vmatprep.subr.bf16.mxu0 0
    %758 = vmatpush1.bf16.msra.mxu0 0
    %759 = vmatprep.mubr.bf16.mxu0 0
    %760 = vmatmul.mubr.bf16.gmra.mrb[0].mxu0 %v725
    %v761 = vpop.f32.mrb[0].mxu0
    %v762 = vadd.f32 0.0, %v761
    %v763 = vpop.f32.mrb[0].mxu0
    %v764 = vpop.f32.mrb[0].mxu0
    %v765 = vadd.f32 0.0, %v764
    %v766 = vpop.f32.mrb[0].mxu0
    %767 = vdwg.mxu0
    %770 = vrot.lane.b32.xlu0 %v508, 8
    %v771 = vpop.permute.xlu0 %770
    %772 = vrot.lane.b32.xlu0 %v511, 8
    %v773 = vpop.permute.xlu0 %772
    %778 = vrot.lane.b32.xlu0 %v635, 16
    %v779 = vpop.permute.xlu0 %778
    %780 = vrot.lane.b32.xlu0 %v638, 16
    %v781 = vpop.permute.xlu0 %780
    %786 = vrot.lane.b32.xlu0 %v762, 24
    %v787 = vpop.permute.xlu0 %786
    %788 = vrot.lane.b32.xlu0 %v765, 24
    %v789 = vpop.permute.xlu0 %788
    %v792 = vsel %vm262, %v378, %v771
    %v793 = vsel %vm262, %v381, %v773
    %v794 = vsel %vm314, %v792, %v779
    %v795 = vsel %vm314, %v793, %v781
    %vm796 = vcmask 195584
    %v797 = vsel %vm796, %v794, %v787
    %v798 = vsel %vm796, %v795, %v789
    %v799 = vpack.c.bf16 %v798, %v797
    %v800 = vlaneseq
    %v801 = vshrl.u32 %v800, 7
    %v802 = vsub.s32 3, %v801
    %v803 = vrot.slane %v70, %v802
    %804 = vrot.lane.b32.xlu0 %v90, 32
    %v805 = vpop.permute.xlu0 %804
    %806 = vrot.lane.b32.xlu0 %v91, 32
    %v807 = vpop.permute.xlu0 %806
    %v811 = vsel %vm94, %v799, 0
    %813 = vmatprep.subr.bf16.mxu0 0
    %814 = vmatpush1.bf16.msra.mxu0 %v805
    %815 = vmatprep.subr.bf16.mxu0 0
    %816 = vmatpush1.bf16.msra.mxu0 %v807
    %817 = vmatprep.subr.bf16.mxu0 0
    %818 = vmatpush1.bf16.msra.mxu0 0
    %819 = vmatprep.subr.bf16.mxu0 0
    %820 = vmatpush1.bf16.msra.mxu0 0
    %821 = vmatprep.subr.bf16.mxu0 0
    %822 = vmatpush1.bf16.msra.mxu0 0
    %823 = vmatprep.subr.bf16.mxu0 0
    %824 = vmatpush1.bf16.msra.mxu0 0
    %825 = vmatprep.subr.bf16.mxu0 0
    %826 = vmatpush1.bf16.msra.mxu0 0
    %827 = vmatprep.subr.bf16.mxu0 0
    %828 = vmatpush1.bf16.msra.mxu0 0
    %829 = vmatprep.subr.bf16.mxu0 0
    %830 = vmatpush1.bf16.msra.mxu0 0
    %831 = vmatprep.subr.bf16.mxu0 0
    %832 = vmatpush1.bf16.msra.mxu0 0
    %833 = vmatprep.subr.bf16.mxu0 0
    %834 = vmatpush1.bf16.msra.mxu0 0
    %835 = vmatprep.subr.bf16.mxu0 0
    %836 = vmatpush1.bf16.msra.mxu0 0
    %837 = vmatprep.subr.bf16.mxu0 0
    %838 = vmatpush1.bf16.msra.mxu0 0
    %839 = vmatprep.subr.bf16.mxu0 0
    %840 = vmatpush1.bf16.msra.mxu0 0
    %841 = vmatprep.subr.bf16.mxu0 0
    %842 = vmatpush1.bf16.msra.mxu0 0
    %843 = vmatprep.subr.bf16.mxu0 0
    %844 = vmatpush1.bf16.msra.mxu0 0
    %845 = vmatprep.mubr.bf16.mxu0 0
    %846 = vmatmul.mubr.bf16.gmra.mrb[0].mxu0 %v811
    %v847 = vpop.f32.mrb[0].mxu0
    %v848 = vadd.f32 %v803, %v847
    %v849 = vpop.f32.mrb[0].mxu0
    %v850 = vpop.f32.mrb[0].mxu0
    %v851 = vadd.f32 %v803, %v850
    %v852 = vpop.f32.mrb[0].mxu0
    %853 = vdwg.mxu0
    %v854 = vadd.f32 %v848, %v71
    %v855 = vadd.f32 %v851, %v72
    %v856 = vsel %vm94, %v854, 0.0
    %857 = vadd.xlane.f32.xlu0 %v856
    %v858 = vpop.xlane.xlu0 %857
    %v859 = vsel %vm94, %v855, 0.0
    %860 = vadd.xlane.f32.xlu0 %v859
    %v861 = vpop.xlane.xlu0 %860
    %v862 = vrcp.pop 32.0
    %v863 = vmul.f32 %v858, %v862
    %v864 = vmul.f32 %v861, %v862
    %v865 = vsub.f32 %v854, %v863
    %v866 = vsub.f32 %v855, %v864
    %v867 = vmul.f32 %v865, %v865
    %v868 = vmul.f32 %v866, %v866
    %v869 = vsel %vm94, %v867, 0.0
    %870 = vadd.xlane.f32.xlu0 %v869
    %v871 = vpop.xlane.xlu0 %870
    %v872 = vsel %vm94, %v868, 0.0
    %873 = vadd.xlane.f32.xlu0 %v872
    %v874 = vpop.xlane.xlu0 %873
    %v875 = vmul.f32 %v871, %v862
    %v876 = vmul.f32 %v874, %v862
    %v877 = vadd.f32 %v875, 1e-05
    %v878 = vadd.f32 %v876, 1e-05
    %v879 = vrsqrt.pop %v877
    %v880 = vrsqrt.pop %v878
    %v881 = vmul.f32 %v865, %v879
    %v882 = vmul.f32 %v866, %v880
    %v883 = vlaneseq
    %v884 = vshrl.u32 %v883, 7
    %v885 = vsub.s32 4, %v884
    %v886 = vrot.slane %v70, %v885
    %v887 = vmul.f32 %v881, %v886
    %v888 = vmul.f32 %v882, %v886
    %v889 = vlaneseq
    %v890 = vshrl.u32 %v889, 7
    %v891 = vsub.s32 5, %v890
    %v892 = vrot.slane %v70, %v891
    %v893 = vadd.f32 %v887, %v892
    %v894 = vadd.f32 %v888, %v892
    %895 = vst.msk [vmem:[#allocation8] sm:$0xff] %vm94, %v893
    %896 = vst.msk [vmem:[#allocation8 + $0x8] sm:$0xff] %vm94, %v894
    %v897 = vand.u32 %v253, 7
    %v898 = vand.u32 %v254, 7
    %v899 = vmul.u32 %v897, 2
    %v900 = vmul.u32 %v898, 2
    %v901 = vshra.s32 %v253, 3
    %v902 = vshra.s32 %v254, 3
    %v903 = vadd.s32 %v899, %v901
    %v904 = vadd.s32 %v900, %v902
    %vm905 = vcmp.eq.s32.totalorder %v256, %v903
    %vm906 = vcmp.eq.s32.totalorder %v256, %v904
    %v907 = vsel %vm905, 1, 0
    %v908 = vsel %vm906, 1, 0
    %v909 = vcvt.s32.f32 %v907
    %v910 = vcvt.s32.f32 %v908
    %v911 = vshra.s32 %v253, 1
    %v912 = vshra.s32 %v254, 1
    %vm913 = vcmp.eq.s32.totalorder %v911, %v256
    %vm914 = vcmp.eq.s32.totalorder %v912, %v256
    %v915 = vsel %vm913, 1, 0
    %v916 = vsel %vm914, 1, 0
    %v917 = vcvt.s32.f32 %v915
    %v918 = vcvt.s32.f32 %v916
    %v920 = vsel %vm314, %v909, 0
    %v923 = vsel %vm314, %v910, 0
    %925 = vmatprep.subr.mxu0 0.0
    %926 = vmatpush1.msra.mxu0 %v718
    %927 = vmatprep.subr.mxu0 0.0
    %928 = vmatpush1.msra.mxu0 %v719
    %929 = vmatprep.subr.mxu0 0.0
    %930 = vmatpush1.msra.mxu0 0.0
    %931 = vmatprep.subr.mxu0 0.0
    %932 = vmatpush1.msra.mxu0 0.0
    %933 = vmatprep.subr.mxu0 0.0
    %934 = vmatpush1.msra.mxu0 0.0
    %935 = vmatprep.subr.mxu0 0.0
    %936 = vmatpush1.msra.mxu0 0.0
    %937 = vmatprep.subr.mxu0 0.0
    %938 = vmatpush1.msra.mxu0 0.0
    %939 = vmatprep.subr.mxu0 0.0
    %940 = vmatpush1.msra.mxu0 0.0
    %941 = vmatprep.subr.mxu0 0.0
    %942 = vmatpush1.msra.mxu0 0.0
    %943 = vmatprep.subr.mxu0 0.0
    %944 = vmatpush1.msra.mxu0 0.0
    %945 = vmatprep.subr.mxu0 0.0
    %946 = vmatpush1.msra.mxu0 0.0
    %947 = vmatprep.subr.mxu0 0.0
    %948 = vmatpush1.msra.mxu0 0.0
    %949 = vmatprep.subr.mxu0 0.0
    %950 = vmatpush1.msra.mxu0 0.0
    %951 = vmatprep.subr.mxu0 0.0
    %952 = vmatpush1.msra.mxu0 0.0
    %953 = vmatprep.subr.mxu0 0.0
    %954 = vmatpush1.msra.mxu0 0.0
    %955 = vmatprep.subr.mxu0 0.0
    %956 = vmatpush1.msra.mxu0 0.0
    %957 = vmatprep.subr.mxu0 0.0
    %958 = vmatpush1.msra.mxu0 0.0
    %959 = vmatprep.subr.mxu0 0.0
    %960 = vmatpush1.msra.mxu0 0.0
    %961 = vmatprep.subr.mxu0 0.0
    %962 = vmatpush1.msra.mxu0 0.0
    %963 = vmatprep.subr.mxu0 0.0
    %964 = vmatpush1.msra.mxu0 0.0
    %965 = vmatprep.subr.mxu0 0.0
    %966 = vmatpush1.msra.mxu0 0.0
    %967 = vmatprep.subr.mxu0 0.0
    %968 = vmatpush1.msra.mxu0 0.0
    %969 = vmatprep.subr.mxu0 0.0
    %970 = vmatpush1.msra.mxu0 0.0
    %971 = vmatprep.subr.mxu0 0.0
    %972 = vmatpush1.msra.mxu0 0.0
    %973 = vmatprep.subr.mxu0 0.0
    %974 = vmatpush1.msra.mxu0 0.0
    %975 = vmatprep.subr.mxu0 0.0
    %976 = vmatpush1.msra.mxu0 0.0
    %977 = vmatprep.subr.mxu0 0.0
    %978 = vmatpush1.msra.mxu0 0.0
    %979 = vmatprep.subr.mxu0 0.0
    %980 = vmatpush1.msra.mxu0 0.0
    %981 = vmatprep.subr.mxu0 0.0
    %982 = vmatpush1.msra.mxu0 0.0
    %983 = vmatprep.subr.mxu0 0.0
    %984 = vmatpush1.msra.mxu0 0.0
    %985 = vmatprep.subr.mxu0 0.0
    %986 = vmatpush1.msra.mxu0 0.0
    %987 = vmatprep.subr.mxu0 0.0
    %988 = vmatpush1.msra.mxu0 0.0
    %989 = vmatprep.mubr.f32.mxu0 0.0
    %990 = vmatmul.mubr.f32.gmra.mrb[0].mxu0 %v920
    %v991 = vpop.f32.mrb[0].mxu0
    %v992 = vadd.f32 0.0, %v991
    %v993 = vpop.f32.mrb[0].mxu0
    %994 = vmatprep.mubr.f32.mxu0 0.0
    %995 = vmatmul.mubr.f32.gmra.mrb[0].mxu0 %v923
    %v996 = vpop.f32.mrb[0].mxu0
    %v997 = vadd.f32 0.0, %v996
    %v998 = vpop.f32.mrb[0].mxu0
    %999 = vdwg.mxu0
    %v1001 = vsel %vm314, %v992, 0
    %v1004 = vsel %vm314, %v997, 0
    %1006 = vmatprep.subr.mxu0 0.0
    %1007 = vmatpush1.msra.mxu0 %v917
    %1008 = vmatprep.subr.mxu0 0.0
    %1009 = vmatpush1.msra.mxu0 %v918
    %1010 = vmatprep.subr.mxu0 0.0
    %1011 = vmatpush1.msra.mxu0 0.0
    %1012 = vmatprep.subr.mxu0 0.0
    %1013 = vmatpush1.msra.mxu0 0.0
    %1014 = vmatprep.subr.mxu0 0.0
    %1015 = vmatpush1.msra.mxu0 0.0
    %1016 = vmatprep.subr.mxu0 0.0
    %1017 = vmatpush1.msra.mxu0 0.0
    %1018 = vmatprep.subr.mxu0 0.0
    %1019 = vmatpush1.msra.mxu0 0.0
    %1020 = vmatprep.subr.mxu0 0.0
    %1021 = vmatpush1.msra.mxu0 0.0
    %1022 = vmatprep.subr.mxu0 0.0
    %1023 = vmatpush1.msra.mxu0 0.0
    %1024 = vmatprep.subr.mxu0 0.0
    %1025 = vmatpush1.msra.mxu0 0.0
    %1026 = vmatprep.subr.mxu0 0.0
    %1027 = vmatpush1.msra.mxu0 0.0
    %1028 = vmatprep.subr.mxu0 0.0
    %1029 = vmatpush1.msra.mxu0 0.0
    %1030 = vmatprep.subr.mxu0 0.0
    %1031 = vmatpush1.msra.mxu0 0.0
    %1032 = vmatprep.subr.mxu0 0.0
    %1033 = vmatpush1.msra.mxu0 0.0
    %1034 = vmatprep.subr.mxu0 0.0
    %1035 = vmatpush1.msra.mxu0 0.0
    %1036 = vmatprep.subr.mxu0 0.0
    %1037 = vmatpush1.msra.mxu0 0.0
    %1038 = vmatprep.subr.mxu0 0.0
    %1039 = vmatpush1.msra.mxu0 0.0
    %1040 = vmatprep.subr.mxu0 0.0
    %1041 = vmatpush1.msra.mxu0 0.0
    %1042 = vmatprep.subr.mxu0 0.0
    %1043 = vmatpush1.msra.mxu0 0.0
    %1044 = vmatprep.subr.mxu0 0.0
    %1045 = vmatpush1.msra.mxu0 0.0
    %1046 = vmatprep.subr.mxu0 0.0
    %1047 = vmatpush1.msra.mxu0 0.0
    %1048 = vmatprep.subr.mxu0 0.0
    %1049 = vmatpush1.msra.mxu0 0.0
    %1050 = vmatprep.subr.mxu0 0.0
    %1051 = vmatpush1.msra.mxu0 0.0
    %1052 = vmatprep.subr.mxu0 0.0
    %1053 = vmatpush1.msra.mxu0 0.0
    %1054 = vmatprep.subr.mxu0 0.0
    %1055 = vmatpush1.msra.mxu0 0.0
    %1056 = vmatprep.subr.mxu0 0.0
    %1057 = vmatpush1.msra.mxu0 0.0
    %1058 = vmatprep.subr.mxu0 0.0
    %1059 = vmatpush1.msra.mxu0 0.0
    %1060 = vmatprep.subr.mxu0 0.0
    %1061 = vmatpush1.msra.mxu0 0.0
    %1062 = vmatprep.subr.mxu0 0.0
    %1063 = vmatpush1.msra.mxu0 0.0
    %1064 = vmatprep.subr.mxu0 0.0
    %1065 = vmatpush1.msra.mxu0 0.0
    %1066 = vmatprep.subr.mxu0 0.0
    %1067 = vmatpush1.msra.mxu0 0.0
    %1068 = vmatprep.subr.mxu0 0.0
    %1069 = vmatpush1.msra.mxu0 0.0
    %1070 = vmatprep.mubr.f32.mxu0 0.0
    %1071 = vmatmul.mubr.f32.gmra.mrb[0].mxu0 %v1001
    %v1072 = vpop.f32.mrb[0].mxu0
    %v1073 = vadd.f32 0.0, %v1072
    %v1074 = vpop.f32.mrb[0].mxu0
    %1075 = vmatprep.mubr.f32.mxu0 0.0
    %1076 = vmatmul.mubr.f32.gmra.mrb[0].mxu0 %v1004
    %v1077 = vpop.f32.mrb[0].mxu0
    %v1078 = vadd.f32 0.0, %v1077
    %v1079 = vpop.f32.mrb[0].mxu0
    %1080 = vdwg.mxu0
    %v1081 = vmul.f32 %v1073, 0.25
    %v1082 = vmul.f32 %v1078, 0.25
    %1083 = vst.msk [vmem:[#allocation9] sm:$0xff] %vm262, %v1081
    %1084 = vst.msk [vmem:[#allocation9 + $0x8] sm:$0xff] %vm262, %v1082
    // Predicated region
    $region34: #{self_attention_forward.1} parent=1 // pred_check
      _
    $region35: #{self_attention_forward.1} parent=1 // pred_check_branch
      %1086 = sbr.rel (0) target = $region37
    $region36: #{self_attention_forward.1} parent=1 // pred_region
      %s1088 = ssub.s32 256, 256
      %1089 = vsyncadd [#allocation4], %s1088
      %s1090 = sshll.u32 [#allocation8], 4
      %s1091 = int_to_ptr.vmem [resolvable:$true] %s1090
      %1096 = dma.vmem_to_hbm [thread:$0]  %s1091, 256, %s5, [#allocation4], 128, 128, 8
    $region37: #{self_attention_forward.1} parent=1 // pred_fallthru
      _
    // Predicated region
    $region38: #{self_attention_forward.1} parent=1 // pred_check
      _
    $region39: #{self_attention_forward.1} parent=1 // pred_check_branch
      %1098 = sbr.rel (0) target = $region41
    $region40: #{self_attention_forward.1} parent=1 // pred_region
      %s1100 = ssub.s32 256, 256
      %1101 = vsyncadd [#allocation10], %s1100
      %s1102 = sshll.u32 [#allocation9], 4
      %s1103 = int_to_ptr.vmem [resolvable:$true] %s1102
      %1108 = dma.vmem_to_hbm [thread:$0]  %s1103, 256, %s6, [#allocation10], 128, 128, 8
    $region41: #{self_attention_forward.1} parent=1 // pred_fallthru
      _
    // Predicated region
    $region42: #{self_attention_forward.1} parent=1 // pred_check
      _
    $region43: #{self_attention_forward.1} parent=1 // pred_check_branch
      %1110 = sbr.rel (0) target = $region45
    $region44: #{self_attention_forward.1} parent=1 // pred_region
      %1111 = dma.done [#allocation4], 256
    $region45: #{self_attention_forward.1} parent=1 // pred_fallthru
      _
    // Predicated region
    $region46: #{self_attention_forward.1} parent=1 // pred_check
      _
    $region47: #{self_attention_forward.1} parent=1 // pred_check_branch
      %1113 = sbr.rel (0) target = $region49
    $region48: #{self_attention_forward.1} parent=1 // pred_region
      %1114 = dma.done [#allocation10], 256
    $region49: #{self_attention_forward.1} parent=1 // pred_fallthru
      _
    %1115 = vsyncpa [#allocation3], 1
    %1116 = vsyncpa [#allocation6], 1
    %1117 = vsyncpa [#allocation4], 1
    %1118 = vsyncpa [#allocation10], 1

</llo_original>
